<compile_context>
chip_gen: v7x
topology: tpu7x:2x2x1
jax: 0.10.0
libtpu: 0.0.40
codegen_flags: <defaults>
</compile_context>

<pallas_src>
import jax
import jax.numpy as jnp
from jax import lax
from jax.experimental import pallas as pl
from jax.experimental.pallas import tpu as pltpu
import numpy as np


def po_crl_kernel(x_ref, w1T_ref, b1T_ref, w2T_ref, b2T_ref, w3T_ref, b3T_ref,
                  w4T_ref, biasT_ref, ltri_ref, outT_ref):
    x = x_ref[...]                                                     # (TB, d) batch-major

    # --- MLP in (features, batch) layout: lane dim = batch tile (dense) ---
    # First layer contracts d on both operands (== W1 @ x^T): no wrapper x.T.
    dn = (((1,), (1,)), ((), ()))
    h = jax.nn.sigmoid(
        lax.dot_general(w1T_ref[...], x, dn,
                        preferred_element_type=jnp.float32) + b1T_ref[...])     # (M, TB)
    h = jax.nn.sigmoid(
        jnp.dot(w2T_ref[...], h, preferred_element_type=jnp.float32) + b2T_ref[...])
    h = jax.nn.sigmoid(
        jnp.dot(w3T_ref[...], h, preferred_element_type=jnp.float32) + b3T_ref[...])

    # --- fused head + sentinel mask: tmp[k,n] = bi_pad[k] - mask[k]*(w4.h+b4) ---
    tmp = biasT_ref[...] - jnp.dot(w4T_ref[...], h,
                                   preferred_element_type=jnp.float32)          # (K, TB)

    # --- fused log-sigmoid pair: one exp + one log serve both branches ---
    #   log sigmoid(-t) = -(relu(t)  + log(1 + exp(-|t|)))
    #   log sigmoid( t) = -(relu(-t) + log(1 + exp(-|t|)))
    e = jnp.exp(-jnp.abs(tmp))
    L = jnp.log(1.0 + e)
    log_neg = -(jnp.maximum(tmp, 0.0) + L)                             # log sigmoid(-tmp_j)
    log_pos = -(jnp.maximum(-tmp, 0.0) + L)                            # log sigmoid(tmp_k)

    # exclusive prefix-sum over j<k via precomputed strictly-lower-tri matmul.
    # (f32 MXU at default precision passes 1e-5 at K=8/M=32; switch to HIGHEST
    #  precision or a cumsum if K/M grow or bf16 is adopted.)
    excl = jnp.dot(ltri_ref[...], log_neg, preferred_element_type=jnp.float32)

    outT_ref[...] = jnp.exp(log_pos + excl)                            # (K, TB)


def prepare_params(params, K):
    """One-time constant folding: transposed weights, fused head, tri mask."""
    w1, b1, w2, b2, w3, b3, w4, b4, tmp_bi = params
    M = w1.shape[1]

    bi = jnp.concatenate([jnp.zeros((1,), jnp.float32), tmp_bi])        # (K-1,)
    bi_pad = jnp.concatenate([bi, jnp.array([1.0e6], jnp.float32)])     # (K,)
    mvec = jnp.concatenate([jnp.ones((K - 1,), jnp.float32),
                            jnp.zeros((1,), jnp.float32)])              # (K,)

    # tmp = bi_pad - mvec * (h @ w4 + b4)  ==  bias' - W4' @ h^T   (transposed)
    w4T = jnp.outer(mvec, w4[:, 0])                                     # (K, M)
    biasT = (bi_pad - b4[0, 0] * mvec).reshape(K, 1)                    # (K, 1)

    # ltri[k, j] = 1 if j < k else 0  (exclusive prefix sum)
    ltri = (jnp.arange(K)[:, None] > jnp.arange(K)[None, :]).astype(jnp.float32)

    return (jnp.asarray(w1.T), b1.reshape(M, 1),
            jnp.asarray(w2.T), b2.reshape(M, 1),
            jnp.asarray(w3.T), b3.reshape(M, 1),
            w4T, biasT, ltri)


def _default_tile_b(N):
    """Single grid step on 1-TC chips (v5e/v6e); two even 128-aligned tiles on v7x."""
    try:
        kind = jax.devices()[0].device_kind.lower()
    except Exception:
        kind = ""
    if "v7" in kind and N >= 256:
        return ((pl.cdiv(N, 2) + 127) // 128) * 128
    return N


def po_crl_forward(x, prepared, K, *, tile_b=None, transpose_out=True):
    w1T, b1T, w2T, b2T, w3T, b3T, w4T, biasT, ltri = prepared
    N, d = x.shape
    M = w1T.shape[0]

    if tile_b is None:
        tile_b = _default_tile_b(N)

    if tile_b >= N:
        tile_b, n_tiles, n_pad = N, 1, N          # single step: full-array blocks, no pad
    else:
        tile_b = ((tile_b + 127) // 128) * 128    # lane-dense output tiles
        n_tiles = pl.cdiv(N, tile_b)
        n_pad = n_tiles * tile_b

    xin = x if n_pad == N else jnp.pad(x, ((0, n_pad - N), (0, 0)))

    full = lambda shape: pl.BlockSpec(shape, lambda i: (0, 0))

    outT = pl.pallas_call(
        po_crl_kernel,
        out_shape=jax.ShapeDtypeStruct((K, n_pad), jnp.float32),
        grid=(n_tiles,),
        in_specs=[
            pl.BlockSpec((tile_b, d), lambda i: (i, 0)),   # x, batch-major (no wrapper x.T)
            full((M, d)), full((M, 1)),                    # g1
            full((M, M)), full((M, 1)),                    # g2
            full((M, M)), full((M, 1)),                    # g3
            full((K, M)), full((K, 1)),                    # fused head W4', bias'
            full((K, K)),                                  # strictly-lower-tri mask
        ],
        out_specs=pl.BlockSpec((K, tile_b), lambda i: (0, i)),
        compiler_params=pltpu.CompilerParams(dimension_semantics=("parallel",)),
    )(xin, w1T, b1T, w2T, b2T, w3T, b3T, w4T, biasT, ltri)

    out = outT if n_pad == N else outT[:, :N]
    return out.T if transpose_out else out                              # (N,K) or (K,N)


def init_params(key, d, M, K):
    ks = jax.random.split(key, 8)
    std = 0.1
    w1 = std * jax.random.normal(ks[0], (d, M), jnp.float32)
    b1 = std * jax.random.normal(ks[1], (1, M), jnp.float32)
    w2 = std * jax.random.normal(ks[2], (M, M), jnp.float32)
    b2 = std * jax.random.normal(ks[3], (1, M), jnp.float32)
    w3 = std * jax.random.normal(ks[4], (M, M), jnp.float32)
    b3 = std * jax.random.normal(ks[5], (1, M), jnp.float32)
    w4 = std * jax.random.normal(ks[6], (M, 1), jnp.float32)
    b4 = std * jax.random.normal(ks[7], (1, 1), jnp.float32)
    tmp_bi = jnp.arange(1, K - 1, dtype=jnp.float32)    # nn.Parameter init value
    return (w1, b1, w2, b2, w3, b3, w4, b4, tmp_bi)


def reference_forward(x, params, K):
    """Pure-JAX transliteration of the PyTorch forward (incl. the double loop)."""
    w1, b1, w2, b2, w3, b3, w4, b4, tmp_bi = params
    g = jax.nn.sigmoid(x @ w1 + b1)
    g = jax.nn.sigmoid(g @ w2 + b2)
    g = jax.nn.sigmoid(g @ w3 + b3)
    g = g @ w4 + b4                                                    # (N, 1)
    bi = jnp.concatenate([jnp.zeros((1,), jnp.float32), tmp_bi])       # (K-1,)
    tmp = bi[None, :] - g                                              # (N, K-1)
    tmp = jnp.concatenate([tmp, 1.0e6 * jnp.ones((x.shape[0], 1), jnp.float32)], axis=1)
    pro = jnp.ones((x.shape[0], K), jnp.float32)
    for k in range(K):
        col = pro[:, k]
        for j in range(k):
            col = col * jax.nn.sigmoid(-tmp[:, j])
        col = col * jax.nn.sigmoid(tmp[:, k])
        pro = pro.at[:, k].set(col)
    return pro


if __name__ == "__main__":
    d, M, K = 32, 32, 8
    N = 512

    key = jax.random.PRNGKey(0)
    kx, kp = jax.random.split(key)
    x = jax.random.normal(kx, (N, d), jnp.float32)
    params = init_params(kp, d, M, K)

    prepared = prepare_params(params, K)             # hoisted constant folding
    pro = po_crl_forward(x, prepared, K)             # auto tile: 1 step (v5e/v6e), 2 on v7x
    pro = jax.block_until_ready(pro)

    ref = reference_forward(x, params, K)
    np.testing.assert_allclose(np.asarray(pro), np.asarray(ref), rtol=1e-5, atol=1e-5)

    print("KERNEL_OK")
</pallas_src>

<mosaic_0001>
module attributes {stable_mosaic.version = 11 : i64} {
  func.func @po_crl_kernel(%arg0: i32, %arg1: memref<512x32xf32, #tpu.memory_space<vmem>>, %arg2: memref<32x32xf32, #tpu.memory_space<vmem>>, %arg3: memref<32x1xf32, #tpu.memory_space<vmem>>, %arg4: memref<32x32xf32, #tpu.memory_space<vmem>>, %arg5: memref<32x1xf32, #tpu.memory_space<vmem>>, %arg6: memref<32x32xf32, #tpu.memory_space<vmem>>, %arg7: memref<32x1xf32, #tpu.memory_space<vmem>>, %arg8: memref<8x32xf32, #tpu.memory_space<vmem>>, %arg9: memref<8x1xf32, #tpu.memory_space<vmem>>, %arg10: memref<8x8xf32, #tpu.memory_space<vmem>>, %arg11: memref<8x512xf32, #tpu.memory_space<vmem>>) attributes {dimension_semantics = [#tpu.dimension_semantics<parallel>], iteration_bounds = array<i64: 1>, scalar_prefetch = 0 : i64, scratch_operands = 0 : i64, tpu.core_type = #tpu.core_type<tc>, window_params = [{transform_indices = @transform_0, window_bounds = array<i64: 512, 32>}, {pipeline_mode = #tpu.pipeline_mode<synchronous>, transform_indices = @transform_1, window_bounds = array<i64: 32, 32>}, {pipeline_mode = #tpu.pipeline_mode<synchronous>, transform_indices = @transform_2, window_bounds = array<i64: 32, 1>}, {pipeline_mode = #tpu.pipeline_mode<synchronous>, transform_indices = @transform_3, window_bounds = array<i64: 32, 32>}, {pipeline_mode = #tpu.pipeline_mode<synchronous>, transform_indices = @transform_4, window_bounds = array<i64: 32, 1>}, {pipeline_mode = #tpu.pipeline_mode<synchronous>, transform_indices = @transform_5, window_bounds = array<i64: 32, 32>}, {pipeline_mode = #tpu.pipeline_mode<synchronous>, transform_indices = @transform_6, window_bounds = array<i64: 32, 1>}, {pipeline_mode = #tpu.pipeline_mode<synchronous>, transform_indices = @transform_7, window_bounds = array<i64: 8, 32>}, {pipeline_mode = #tpu.pipeline_mode<synchronous>, transform_indices = @transform_8, window_bounds = array<i64: 8, 1>}, {pipeline_mode = #tpu.pipeline_mode<synchronous>, transform_indices = @transform_9, window_bounds = array<i64: 8, 8>}, {transform_indices = @transform_10, window_bounds = array<i64: 8, 512>}]} {
    %c0 = arith.constant 0 : index
    %c0_0 = arith.constant 0 : index
    %0 = vector.load %arg1[%c0, %c0_0] : memref<512x32xf32, #tpu.memory_space<vmem>>, vector<512x32xf32>
    %c0_1 = arith.constant 0 : index
    %c0_2 = arith.constant 0 : index
    %1 = vector.load %arg2[%c0_1, %c0_2] : memref<32x32xf32, #tpu.memory_space<vmem>>, vector<32x32xf32>
    %cst = arith.constant dense<0.000000e+00> : vector<32x512xf32>
    %2 = tpu.matmul %1, %0, %cst {dimension_numbers = #tpu.dot_dimension_numbers<[1], [1], [0], [0], [0, 0, 1, 0], [], []>} : vector<32x32xf32>, vector<512x32xf32>, vector<32x512xf32> -> vector<32x512xf32>
    %c0_3 = arith.constant 0 : index
    %c0_4 = arith.constant 0 : index
    %3 = vector.load %arg3[%c0_3, %c0_4] : memref<32x1xf32, #tpu.memory_space<vmem>>, vector<32x1xf32>
    %4 = vector.broadcast %3 : vector<32x1xf32> to vector<32x512xf32>
    %5 = arith.addf %2, %4 : vector<32x512xf32>
    %6 = arith.negf %5 : vector<32x512xf32>
    %7 = math.exp %6 : vector<32x512xf32>
    %cst_5 = arith.constant 1.000000e+00 : f32
    %8 = vector.broadcast %cst_5 : f32 to vector<32x512xf32>
    %9 = arith.addf %8, %7 : vector<32x512xf32>
    %10 = arith.divf %8, %9 : vector<32x512xf32>
    %c0_6 = arith.constant 0 : index
    %c0_7 = arith.constant 0 : index
    %11 = vector.load %arg4[%c0_6, %c0_7] : memref<32x32xf32, #tpu.memory_space<vmem>>, vector<32x32xf32>
    %cst_8 = arith.constant dense<0.000000e+00> : vector<32x512xf32>
    %12 = tpu.matmul %11, %10, %cst_8 {dimension_numbers = #tpu.dot_dimension_numbers<[1], [0], [0], [1], [0, 0, 1, 1], [], []>} : vector<32x32xf32>, vector<32x512xf32>, vector<32x512xf32> -> vector<32x512xf32>
    %c0_9 = arith.constant 0 : index
    %c0_10 = arith.constant 0 : index
    %13 = vector.load %arg5[%c0_9, %c0_10] : memref<32x1xf32, #tpu.memory_space<vmem>>, vector<32x1xf32>
    %14 = vector.broadcast %13 : vector<32x1xf32> to vector<32x512xf32>
    %15 = arith.addf %12, %14 : vector<32x512xf32>
    %16 = arith.negf %15 : vector<32x512xf32>
    %17 = math.exp %16 : vector<32x512xf32>
    %cst_11 = arith.constant 1.000000e+00 : f32
    %18 = vector.broadcast %cst_11 : f32 to vector<32x512xf32>
    %19 = arith.addf %18, %17 : vector<32x512xf32>
    %20 = arith.divf %18, %19 : vector<32x512xf32>
    %c0_12 = arith.constant 0 : index
    %c0_13 = arith.constant 0 : index
    %21 = vector.load %arg6[%c0_12, %c0_13] : memref<32x32xf32, #tpu.memory_space<vmem>>, vector<32x32xf32>
    %cst_14 = arith.constant dense<0.000000e+00> : vector<32x512xf32>
    %22 = tpu.matmul %21, %20, %cst_14 {dimension_numbers = #tpu.dot_dimension_numbers<[1], [0], [0], [1], [0, 0, 1, 1], [], []>} : vector<32x32xf32>, vector<32x512xf32>, vector<32x512xf32> -> vector<32x512xf32>
    %c0_15 = arith.constant 0 : index
    %c0_16 = arith.constant 0 : index
    %23 = vector.load %arg7[%c0_15, %c0_16] : memref<32x1xf32, #tpu.memory_space<vmem>>, vector<32x1xf32>
    %24 = vector.broadcast %23 : vector<32x1xf32> to vector<32x512xf32>
    %25 = arith.addf %22, %24 : vector<32x512xf32>
    %26 = arith.negf %25 : vector<32x512xf32>
    %27 = math.exp %26 : vector<32x512xf32>
    %cst_17 = arith.constant 1.000000e+00 : f32
    %28 = vector.broadcast %cst_17 : f32 to vector<32x512xf32>
    %29 = arith.addf %28, %27 : vector<32x512xf32>
    %30 = arith.divf %28, %29 : vector<32x512xf32>
    %c0_18 = arith.constant 0 : index
    %c0_19 = arith.constant 0 : index
    %31 = vector.load %arg9[%c0_18, %c0_19] : memref<8x1xf32, #tpu.memory_space<vmem>>, vector<8x1xf32>
    %c0_20 = arith.constant 0 : index
    %c0_21 = arith.constant 0 : index
    %32 = vector.load %arg8[%c0_20, %c0_21] : memref<8x32xf32, #tpu.memory_space<vmem>>, vector<8x32xf32>
    %cst_22 = arith.constant dense<0.000000e+00> : vector<8x512xf32>
    %33 = tpu.matmul %32, %30, %cst_22 {dimension_numbers = #tpu.dot_dimension_numbers<[1], [0], [0], [1], [0, 0, 1, 1], [], []>} : vector<8x32xf32>, vector<32x512xf32>, vector<8x512xf32> -> vector<8x512xf32>
    %34 = vector.broadcast %31 : vector<8x1xf32> to vector<8x512xf32>
    %35 = arith.subf %34, %33 : vector<8x512xf32>
    %36 = math.absf %35 : vector<8x512xf32>
    %cst_23 = arith.constant 0.000000e+00 : f32
    %37 = vector.broadcast %cst_23 : f32 to vector<8x512xf32>
    %38 = arith.subf %37, %36 : vector<8x512xf32>
    %39 = math.exp %38 : vector<8x512xf32>
    %cst_24 = arith.constant 1.000000e+00 : f32
    %40 = vector.broadcast %cst_24 : f32 to vector<8x512xf32>
    %41 = arith.addf %40, %39 : vector<8x512xf32>
    %42 = math.log %41 : vector<8x512xf32>
    %cst_25 = arith.constant 0.000000e+00 : f32
    %43 = vector.broadcast %cst_25 : f32 to vector<8x512xf32>
    %44 = arith.maximumf %35, %43 : vector<8x512xf32>
    %45 = arith.addf %44, %42 : vector<8x512xf32>
    %cst_26 = arith.constant 0.000000e+00 : f32
    %46 = vector.broadcast %cst_26 : f32 to vector<8x512xf32>
    %47 = arith.subf %46, %45 : vector<8x512xf32>
    %cst_27 = arith.constant 0.000000e+00 : f32
    %48 = vector.broadcast %cst_27 : f32 to vector<8x512xf32>
    %49 = arith.subf %48, %35 : vector<8x512xf32>
    %cst_28 = arith.constant 0.000000e+00 : f32
    %50 = vector.broadcast %cst_28 : f32 to vector<8x512xf32>
    %51 = arith.maximumf %49, %50 : vector<8x512xf32>
    %52 = arith.addf %51, %42 : vector<8x512xf32>
    %cst_29 = arith.constant 0.000000e+00 : f32
    %53 = vector.broadcast %cst_29 : f32 to vector<8x512xf32>
    %54 = arith.subf %53, %52 : vector<8x512xf32>
    %c0_30 = arith.constant 0 : index
    %c0_31 = arith.constant 0 : index
    %55 = vector.load %arg10[%c0_30, %c0_31] : memref<8x8xf32, #tpu.memory_space<vmem>>, vector<8x8xf32>
    %cst_32 = arith.constant dense<0.000000e+00> : vector<8x512xf32>
    %56 = tpu.matmul %55, %47, %cst_32 {dimension_numbers = #tpu.dot_dimension_numbers<[1], [0], [0], [1], [0, 0, 1, 1], [], []>} : vector<8x8xf32>, vector<8x512xf32>, vector<8x512xf32> -> vector<8x512xf32>
    %57 = arith.addf %54, %56 : vector<8x512xf32>
    %58 = math.exp %57 : vector<8x512xf32>
    %c0_33 = arith.constant 0 : index
    %c0_34 = arith.constant 0 : index
    %59 = vector.load %arg11[%c0_33, %c0_34] : memref<8x512xf32, #tpu.memory_space<vmem>>, vector<8x512xf32>
    tpu.vector_store %arg11[%c0_33, %c0_34], %58 {strides = array<i32>} : memref<8x512xf32, #tpu.memory_space<vmem>>, vector<8x512xf32>,
    return
  }
  func.func @transform_0(%arg0: i32) -> (i32, i32) {
    %c0_i32 = arith.constant 0 : i32
    %c0_i32_0 = arith.constant 0 : i32
    return %arg0, %c0_i32 : i32, i32
  }
  func.func @transform_1(%arg0: i32) -> (i32, i32) {
    %c0_i32 = arith.constant 0 : i32
    %c0_i32_0 = arith.constant 0 : i32
    %c0_i32_1 = arith.constant 0 : i32
    return %c0_i32, %c0_i32_0 : i32, i32
  }
  func.func @transform_2(%arg0: i32) -> (i32, i32) {
    %c0_i32 = arith.constant 0 : i32
    %c0_i32_0 = arith.constant 0 : i32
    %c0_i32_1 = arith.constant 0 : i32
    return %c0_i32, %c0_i32_0 : i32, i32
  }
  func.func @transform_3(%arg0: i32) -> (i32, i32) {
    %c0_i32 = arith.constant 0 : i32
    %c0_i32_0 = arith.constant 0 : i32
    %c0_i32_1 = arith.constant 0 : i32
    return %c0_i32, %c0_i32_0 : i32, i32
  }
  func.func @transform_4(%arg0: i32) -> (i32, i32) {
    %c0_i32 = arith.constant 0 : i32
    %c0_i32_0 = arith.constant 0 : i32
    %c0_i32_1 = arith.constant 0 : i32
    return %c0_i32, %c0_i32_0 : i32, i32
  }
  func.func @transform_5(%arg0: i32) -> (i32, i32) {
    %c0_i32 = arith.constant 0 : i32
    %c0_i32_0 = arith.constant 0 : i32
    %c0_i32_1 = arith.constant 0 : i32
    return %c0_i32, %c0_i32_0 : i32, i32
  }
  func.func @transform_6(%arg0: i32) -> (i32, i32) {
    %c0_i32 = arith.constant 0 : i32
    %c0_i32_0 = arith.constant 0 : i32
    %c0_i32_1 = arith.constant 0 : i32
    return %c0_i32, %c0_i32_0 : i32, i32
  }
  func.func @transform_7(%arg0: i32) -> (i32, i32) {
    %c0_i32 = arith.constant 0 : i32
    %c0_i32_0 = arith.constant 0 : i32
    %c0_i32_1 = arith.constant 0 : i32
    return %c0_i32, %c0_i32_0 : i32, i32
  }
  func.func @transform_8(%arg0: i32) -> (i32, i32) {
    %c0_i32 = arith.constant 0 : i32
    %c0_i32_0 = arith.constant 0 : i32
    %c0_i32_1 = arith.constant 0 : i32
    return %c0_i32, %c0_i32_0 : i32, i32
  }
  func.func @transform_9(%arg0: i32) -> (i32, i32) {
    %c0_i32 = arith.constant 0 : i32
    %c0_i32_0 = arith.constant 0 : i32
    %c0_i32_1 = arith.constant 0 : i32
    return %c0_i32, %c0_i32_0 : i32, i32
  }
  func.func @transform_10(%arg0: i32) -> (i32, i32) {
    %c0_i32 = arith.constant 0 : i32
    %c0_i32_0 = arith.constant 0 : i32
    return %c0_i32, %arg0 : i32, i32
  }
}

</mosaic_0001>

<llo_original>
// kernel: tpu_custom_call.1
$region0: #{tpu_custom_call.1}
  #allocation0 [shape = 'u32[]', space=smem, size = 0x4, offset = 0x4, fixed_abs, tag = 'smem constant byte address 0x4 - core index']
  #allocation1 [shape = 'u32[144,128]{1,0:T(1,128)}', space=vmem, size = 0x12000, scoped, tag = 'internal scratch']
  %s0 = inlined_call_operand.vmem [shape: f32[512,32], index: 0, kind: input, shape index: {}]
  %s1 = inlined_call_operand.vmem [shape: f32[32,32], index: 1, kind: input, shape index: {}]
  %s2 = inlined_call_operand.vmem [shape: f32[32,1], index: 2, kind: input, shape index: {}]
  %s3 = inlined_call_operand.vmem [shape: f32[32,32], index: 3, kind: input, shape index: {}]
  %s4 = inlined_call_operand.vmem [shape: f32[32,1], index: 4, kind: input, shape index: {}]
  %s5 = inlined_call_operand.vmem [shape: f32[32,32], index: 5, kind: input, shape index: {}]
  %s6 = inlined_call_operand.vmem [shape: f32[32,1], index: 6, kind: input, shape index: {}]
  %s7 = inlined_call_operand.vmem [shape: f32[8,32], index: 7, kind: input, shape index: {}]
  %s8 = inlined_call_operand.vmem [shape: f32[8,1], index: 8, kind: input, shape index: {}]
  %s9 = inlined_call_operand.vmem [shape: f32[8,8], index: 9, kind: input, shape index: {}]
  %s10 = inlined_call_operand.hbm [shape: f32[8,512], index: 10, kind: output, shape index: {}]
  %s11 = sld [smem:[#allocation0]]
  $region50: #{tpu_custom_call.1} parent=0
    _
  %s13 = ssub.s32 1, %s11
  %s14 = scalar_select 0, %s13, %s11
  $region1: #{tpu_custom_call.1} parent=0
    #allocation2 [shape = 'u8[16384]{0}', space=vmem, size = 0x4000, scoped, tag = 'output window, operand 0, single buffered']
    #allocation3 [shape = 's32[1]{0}', space=sflag, size = 0x4, scoped, tag = 'scoped memory for tpu_custom_call.1']
    %15 = vsyncpa [#allocation3], 0
    // Predicated region
    $region2: #{tpu_custom_call.1} parent=1 // pred_check
      _
    $region3: #{tpu_custom_call.1} parent=1 // pred_check_branch
      %17 = sbr.rel (0) target = $region5
    $region4: #{tpu_custom_call.1} parent=1 // pred_region
      _
    $region5: #{tpu_custom_call.1} parent=1 // pred_fallthru
      _
    // Predicated region
    $region6: #{tpu_custom_call.1} parent=1 // pred_check
      _
    $region7: #{tpu_custom_call.1} parent=1 // pred_check_branch
      %19 = sbr.rel (0) target = $region9
    $region8: #{tpu_custom_call.1} parent=1 // pred_region
      _
    $region9: #{tpu_custom_call.1} parent=1 // pred_fallthru
      _
    // Predicated region
    $region10: #{tpu_custom_call.1} parent=1 // pred_check
      _
    $region11: #{tpu_custom_call.1} parent=1 // pred_check_branch
      %21 = sbr.rel (0) target = $region13
    $region12: #{tpu_custom_call.1} parent=1 // pred_region
      _
    $region13: #{tpu_custom_call.1} parent=1 // pred_fallthru
      _
    // Predicated region
    $region14: #{tpu_custom_call.1} parent=1 // pred_check
      _
    $region15: #{tpu_custom_call.1} parent=1 // pred_check_branch
      %23 = sbr.rel (0) target = $region17
    $region16: #{tpu_custom_call.1} parent=1 // pred_region
      _
    $region17: #{tpu_custom_call.1} parent=1 // pred_fallthru
      _
    // Predicated region
    $region18: #{tpu_custom_call.1} parent=1 // pred_check
      _
    $region19: #{tpu_custom_call.1} parent=1 // pred_check_branch
      %25 = sbr.rel (0) target = $region21
    $region20: #{tpu_custom_call.1} parent=1 // pred_region
      _
    $region21: #{tpu_custom_call.1} parent=1 // pred_fallthru
      _
    // Predicated region
    $region22: #{tpu_custom_call.1} parent=1 // pred_check
      _
    $region23: #{tpu_custom_call.1} parent=1 // pred_check_branch
      %27 = sbr.rel (0) target = $region25
    $region24: #{tpu_custom_call.1} parent=1 // pred_region
      _
    $region25: #{tpu_custom_call.1} parent=1 // pred_fallthru
      _
    // Predicated region
    $region26: #{tpu_custom_call.1} parent=1 // pred_check
      _
    $region27: #{tpu_custom_call.1} parent=1 // pred_check_branch
      %29 = sbr.rel (0) target = $region29
    $region28: #{tpu_custom_call.1} parent=1 // pred_region
      _
    $region29: #{tpu_custom_call.1} parent=1 // pred_fallthru
      _
    // Predicated region
    $region30: #{tpu_custom_call.1} parent=1 // pred_check
      _
    $region31: #{tpu_custom_call.1} parent=1 // pred_check_branch
      %31 = sbr.rel (0) target = $region33
    $region32: #{tpu_custom_call.1} parent=1 // pred_region
      _
    $region33: #{tpu_custom_call.1} parent=1 // pred_fallthru
      _
    // Predicated region
    $region34: #{tpu_custom_call.1} parent=1 // pred_check
      _
    $region35: #{tpu_custom_call.1} parent=1 // pred_check_branch
      %33 = sbr.rel (0) target = $region37
    $region36: #{tpu_custom_call.1} parent=1 // pred_region
      _
    $region37: #{tpu_custom_call.1} parent=1 // pred_fallthru
      _
    // Predicated region
    $region38: #{tpu_custom_call.1} parent=1 // pred_check
      _
    $region39: #{tpu_custom_call.1} parent=1 // pred_check_branch
      %35 = sbr.rel (0) target = $region41
    $region40: #{tpu_custom_call.1} parent=1 // pred_region
      _
    $region41: #{tpu_custom_call.1} parent=1 // pred_fallthru
      _
    %v36 = vld [vmem:[%s0] sm:$0xff]
    %v37 = vld [vmem:[%s0 + $0x8] sm:$0xff]
    %v38 = vld [vmem:[%s0 + $0x10] sm:$0xff]
    %v39 = vld [vmem:[%s0 + $0x18] sm:$0xff]
    %v40 = vld [vmem:[%s0 + $0x20] sm:$0xff]
    %v41 = vld [vmem:[%s0 + $0x28] sm:$0xff]
    %v42 = vld [vmem:[%s0 + $0x30] sm:$0xff]
    %v43 = vld [vmem:[%s0 + $0x38] sm:$0xff]
    %v44 = vld [vmem:[%s0 + $0x40] sm:$0xff]
    %v45 = vld [vmem:[%s0 + $0x48] sm:$0xff]
    %v46 = vld [vmem:[%s0 + $0x50] sm:$0xff]
    %v47 = vld [vmem:[%s0 + $0x58] sm:$0xff]
    %v48 = vld [vmem:[%s0 + $0x60] sm:$0xff]
    %v49 = vld [vmem:[%s0 + $0x68] sm:$0xff]
    %v50 = vld [vmem:[%s0 + $0x70] sm:$0xff]
    %v51 = vld [vmem:[%s0 + $0x78] sm:$0xff]
    %v52 = vld [vmem:[%s0 + $0x80] sm:$0xff]
    %v53 = vld [vmem:[%s0 + $0x88] sm:$0xff]
    %v54 = vld [vmem:[%s0 + $0x90] sm:$0xff]
    %v55 = vld [vmem:[%s0 + $0x98] sm:$0xff]
    %v56 = vld [vmem:[%s0 + $0xa0] sm:$0xff]
    %v57 = vld [vmem:[%s0 + $0xa8] sm:$0xff]
    %v58 = vld [vmem:[%s0 + $0xb0] sm:$0xff]
    %v59 = vld [vmem:[%s0 + $0xb8] sm:$0xff]
    %v60 = vld [vmem:[%s0 + $0xc0] sm:$0xff]
    %v61 = vld [vmem:[%s0 + $0xc8] sm:$0xff]
    %v62 = vld [vmem:[%s0 + $0xd0] sm:$0xff]
    %v63 = vld [vmem:[%s0 + $0xd8] sm:$0xff]
    %v64 = vld [vmem:[%s0 + $0xe0] sm:$0xff]
    %v65 = vld [vmem:[%s0 + $0xe8] sm:$0xff]
    %v66 = vld [vmem:[%s0 + $0xf0] sm:$0xff]
    %v67 = vld [vmem:[%s0 + $0xf8] sm:$0xff]
    %v68 = vld [vmem:[%s0 + $0x100] sm:$0xff]
    %v69 = vld [vmem:[%s0 + $0x108] sm:$0xff]
    %v70 = vld [vmem:[%s0 + $0x110] sm:$0xff]
    %v71 = vld [vmem:[%s0 + $0x118] sm:$0xff]
    %v72 = vld [vmem:[%s0 + $0x120] sm:$0xff]
    %v73 = vld [vmem:[%s0 + $0x128] sm:$0xff]
    %v74 = vld [vmem:[%s0 + $0x130] sm:$0xff]
    %v75 = vld [vmem:[%s0 + $0x138] sm:$0xff]
    %v76 = vld [vmem:[%s0 + $0x140] sm:$0xff]
    %v77 = vld [vmem:[%s0 + $0x148] sm:$0xff]
    %v78 = vld [vmem:[%s0 + $0x150] sm:$0xff]
    %v79 = vld [vmem:[%s0 + $0x158] sm:$0xff]
    %v80 = vld [vmem:[%s0 + $0x160] sm:$0xff]
    %v81 = vld [vmem:[%s0 + $0x168] sm:$0xff]
    %v82 = vld [vmem:[%s0 + $0x170] sm:$0xff]
    %v83 = vld [vmem:[%s0 + $0x178] sm:$0xff]
    %v84 = vld [vmem:[%s0 + $0x180] sm:$0xff]
    %v85 = vld [vmem:[%s0 + $0x188] sm:$0xff]
    %v86 = vld [vmem:[%s0 + $0x190] sm:$0xff]
    %v87 = vld [vmem:[%s0 + $0x198] sm:$0xff]
    %v88 = vld [vmem:[%s0 + $0x1a0] sm:$0xff]
    %v89 = vld [vmem:[%s0 + $0x1a8] sm:$0xff]
    %v90 = vld [vmem:[%s0 + $0x1b0] sm:$0xff]
    %v91 = vld [vmem:[%s0 + $0x1b8] sm:$0xff]
    %v92 = vld [vmem:[%s0 + $0x1c0] sm:$0xff]
    %v93 = vld [vmem:[%s0 + $0x1c8] sm:$0xff]
    %v94 = vld [vmem:[%s0 + $0x1d0] sm:$0xff]
    %v95 = vld [vmem:[%s0 + $0x1d8] sm:$0xff]
    %v96 = vld [vmem:[%s0 + $0x1e0] sm:$0xff]
    %v97 = vld [vmem:[%s0 + $0x1e8] sm:$0xff]
    %v98 = vld [vmem:[%s0 + $0x1f0] sm:$0xff]
    %v99 = vld [vmem:[%s0 + $0x1f8] sm:$0xff]
    %v100 = vld [vmem:[%s1] sm:$0xff]
    %v101 = vld [vmem:[%s1 + $0x8] sm:$0xff]
    %v102 = vld [vmem:[%s1 + $0x10] sm:$0xff]
    %v103 = vld [vmem:[%s1 + $0x18] sm:$0xff]
    %v104 = vld [vmem:[%s2] sm:$0xff]
    %v105 = vld [vmem:[%s2 + $0x8] sm:$0xff]
    %v106 = vld [vmem:[%s2 + $0x10] sm:$0xff]
    %v107 = vld [vmem:[%s2 + $0x18] sm:$0xff]
    %109 = vset.pattern.permute.xlu0 0
    %110 = vperm.xlu0 %109, %v104
    %v111 = vpop.permute.xlu0 %110
    %114 = vset.pattern.permute.xlu0 0
    %115 = vperm.xlu0 %114, %v105
    %v116 = vpop.permute.xlu0 %115
    %119 = vset.pattern.permute.xlu0 0
    %120 = vperm.xlu0 %119, %v106
    %v121 = vpop.permute.xlu0 %120
    %124 = vset.pattern.permute.xlu0 0
    %125 = vperm.xlu0 %124, %v107
    %v126 = vpop.permute.xlu0 %125
    %vm128 = vcmask 261120
    %v130 = vsel %vm128, %v100, 0
    %v133 = vsel %vm128, %v101, 0
    %v136 = vsel %vm128, %v102, 0
    %v139 = vsel %vm128, %v103, 0
    %v142 = vsel %vm128, %v36, 0
    %v145 = vsel %vm128, %v37, 0
    %v148 = vsel %vm128, %v38, 0
    %v151 = vsel %vm128, %v39, 0
    %v154 = vsel %vm128, %v40, 0
    %v157 = vsel %vm128, %v41, 0
    %v160 = vsel %vm128, %v42, 0
    %v163 = vsel %vm128, %v43, 0
    %v166 = vsel %vm128, %v44, 0
    %v169 = vsel %vm128, %v45, 0
    %v172 = vsel %vm128, %v46, 0
    %v175 = vsel %vm128, %v47, 0
    %v178 = vsel %vm128, %v48, 0
    %v181 = vsel %vm128, %v49, 0
    %v184 = vsel %vm128, %v50, 0
    %v187 = vsel %vm128, %v51, 0
    %v190 = vsel %vm128, %v52, 0
    %v193 = vsel %vm128, %v53, 0
    %v196 = vsel %vm128, %v54, 0
    %v199 = vsel %vm128, %v55, 0
    %v202 = vsel %vm128, %v56, 0
    %v205 = vsel %vm128, %v57, 0
    %v208 = vsel %vm128, %v58, 0
    %v211 = vsel %vm128, %v59, 0
    %v214 = vsel %vm128, %v60, 0
    %v217 = vsel %vm128, %v61, 0
    %v220 = vsel %vm128, %v62, 0
    %v223 = vsel %vm128, %v63, 0
    %v226 = vsel %vm128, %v64, 0
    %v229 = vsel %vm128, %v65, 0
    %v232 = vsel %vm128, %v66, 0
    %v235 = vsel %vm128, %v67, 0
    %v238 = vsel %vm128, %v68, 0
    %v241 = vsel %vm128, %v69, 0
    %v244 = vsel %vm128, %v70, 0
    %v247 = vsel %vm128, %v71, 0
    %v250 = vsel %vm128, %v72, 0
    %v253 = vsel %vm128, %v73, 0
    %v256 = vsel %vm128, %v74, 0
    %v259 = vsel %vm128, %v75, 0
    %v262 = vsel %vm128, %v76, 0
    %v265 = vsel %vm128, %v77, 0
    %v268 = vsel %vm128, %v78, 0
    %v271 = vsel %vm128, %v79, 0
    %v274 = vsel %vm128, %v80, 0
    %v277 = vsel %vm128, %v81, 0
    %v280 = vsel %vm128, %v82, 0
    %v283 = vsel %vm128, %v83, 0
    %v286 = vsel %vm128, %v84, 0
    %v289 = vsel %vm128, %v85, 0
    %v292 = vsel %vm128, %v86, 0
    %v295 = vsel %vm128, %v87, 0
    %v298 = vsel %vm128, %v88, 0
    %v301 = vsel %vm128, %v89, 0
    %v304 = vsel %vm128, %v90, 0
    %v307 = vsel %vm128, %v91, 0
    %v310 = vsel %vm128, %v92, 0
    %v313 = vsel %vm128, %v93, 0
    %v316 = vsel %vm128, %v94, 0
    %v319 = vsel %vm128, %v95, 0
    %v322 = vsel %vm128, %v96, 0
    %v325 = vsel %vm128, %v97, 0
    %v328 = vsel %vm128, %v98, 0
    %v331 = vsel %vm128, %v99, 0
    %333 = vmatprep.subr.mxu0 0.0
    %334 = vmatpush1.xpose.msra.mxu0 %v142
    %335 = vmatprep.subr.mxu0 0.0
    %336 = vmatpush1.xpose.msra.mxu0 %v145
    %337 = vmatprep.subr.mxu0 0.0
    %338 = vmatpush1.xpose.msra.mxu0 %v148
    %339 = vmatprep.subr.mxu0 0.0
    %340 = vmatpush1.xpose.msra.mxu0 %v151
    %341 = vmatprep.subr.mxu0 0.0
    %342 = vmatpush1.xpose.msra.mxu0 %v154
    %343 = vmatprep.subr.mxu0 0.0
    %344 = vmatpush1.xpose.msra.mxu0 %v157
    %345 = vmatprep.subr.mxu0 0.0
    %346 = vmatpush1.xpose.msra.mxu0 %v160
    %347 = vmatprep.subr.mxu0 0.0
    %348 = vmatpush1.xpose.msra.mxu0 %v163
    %349 = vmatprep.subr.mxu0 0.0
    %350 = vmatpush1.xpose.msra.mxu0 %v166
    %351 = vmatprep.subr.mxu0 0.0
    %352 = vmatpush1.xpose.msra.mxu0 %v169
    %353 = vmatprep.subr.mxu0 0.0
    %354 = vmatpush1.xpose.msra.mxu0 %v172
    %355 = vmatprep.subr.mxu0 0.0
    %356 = vmatpush1.xpose.msra.mxu0 %v175
    %357 = vmatprep.subr.mxu0 0.0
    %358 = vmatpush1.xpose.msra.mxu0 %v178
    %359 = vmatprep.subr.mxu0 0.0
    %360 = vmatpush1.xpose.msra.mxu0 %v181
    %361 = vmatprep.subr.mxu0 0.0
    %362 = vmatpush1.xpose.msra.mxu0 %v184
    %363 = vmatprep.subr.mxu0 0.0
    %364 = vmatpush1.xpose.msra.mxu0 %v187
    %365 = vmatprep.subr.mxu0 0.0
    %366 = vmatpush1.xpose.msra.mxu0 %v190
    %367 = vmatprep.subr.mxu0 0.0
    %368 = vmatpush1.xpose.msra.mxu0 %v193
    %369 = vmatprep.subr.mxu0 0.0
    %370 = vmatpush1.xpose.msra.mxu0 %v196
    %371 = vmatprep.subr.mxu0 0.0
    %372 = vmatpush1.xpose.msra.mxu0 %v199
    %373 = vmatprep.subr.mxu0 0.0
    %374 = vmatpush1.xpose.msra.mxu0 %v202
    %375 = vmatprep.subr.mxu0 0.0
    %376 = vmatpush1.xpose.msra.mxu0 %v205
    %377 = vmatprep.subr.mxu0 0.0
    %378 = vmatpush1.xpose.msra.mxu0 %v208
    %379 = vmatprep.subr.mxu0 0.0
    %380 = vmatpush1.xpose.msra.mxu0 %v211
    %381 = vmatprep.subr.mxu0 0.0
    %382 = vmatpush1.xpose.msra.mxu0 %v214
    %383 = vmatprep.subr.mxu0 0.0
    %384 = vmatpush1.xpose.msra.mxu0 %v217
    %385 = vmatprep.subr.mxu0 0.0
    %386 = vmatpush1.xpose.msra.mxu0 %v220
    %387 = vmatprep.subr.mxu0 0.0
    %388 = vmatpush1.xpose.msra.mxu0 %v223
    %389 = vmatprep.subr.mxu0 0.0
    %390 = vmatpush1.xpose.msra.mxu0 %v226
    %391 = vmatprep.subr.mxu0 0.0
    %392 = vmatpush1.xpose.msra.mxu0 %v229
    %393 = vmatprep.subr.mxu0 0.0
    %394 = vmatpush1.xpose.msra.mxu0 %v232
    %395 = vmatprep.subr.mxu0 0.0
    %396 = vmatpush1.xpose.msra.mxu0 %v235
    %397 = vmatprep.mubr.f32.mxu0 0.0
    %398 = vmatmul.mubr.f32.gmra.mrb[0].mxu0 %v130
    %v399 = vpop.f32.mrb[0].mxu0
    %v400 = vadd.f32 %v111, %v399
    %v401 = vpop.f32.mrb[0].mxu0
    %v402 = vadd.f32 %v111, %v401
    %403 = vmatprep.mubr.f32.mxu0 0.0
    %404 = vmatmul.mubr.f32.gmra.mrb[0].mxu0 %v133
    %v405 = vpop.f32.mrb[0].mxu0
    %v406 = vadd.f32 %v116, %v405
    %v407 = vpop.f32.mrb[0].mxu0
    %v408 = vadd.f32 %v116, %v407
    %409 = vmatprep.mubr.f32.mxu0 0.0
    %410 = vmatmul.mubr.f32.gmra.mrb[0].mxu0 %v136
    %v411 = vpop.f32.mrb[0].mxu0
    %v412 = vadd.f32 %v121, %v411
    %v413 = vpop.f32.mrb[0].mxu0
    %v414 = vadd.f32 %v121, %v413
    %415 = vmatprep.mubr.f32.mxu0 0.0
    %416 = vmatmul.mubr.f32.gmra.mrb[0].mxu0 %v139
    %v417 = vpop.f32.mrb[0].mxu0
    %v418 = vadd.f32 %v126, %v417
    %v419 = vpop.f32.mrb[0].mxu0
    %v420 = vadd.f32 %v126, %v419
    %421 = vdwg.mxu0
    %422 = vmatprep.subr.mxu0 0.0
    %423 = vmatpush1.xpose.msra.mxu0 %v238
    %424 = vmatprep.subr.mxu0 0.0
    %425 = vmatpush1.xpose.msra.mxu0 %v241
    %426 = vmatprep.subr.mxu0 0.0
    %427 = vmatpush1.xpose.msra.mxu0 %v244
    %428 = vmatprep.subr.mxu0 0.0
    %429 = vmatpush1.xpose.msra.mxu0 %v247
    %430 = vmatprep.subr.mxu0 0.0
    %431 = vmatpush1.xpose.msra.mxu0 %v250
    %432 = vmatprep.subr.mxu0 0.0
    %433 = vmatpush1.xpose.msra.mxu0 %v253
    %434 = vmatprep.subr.mxu0 0.0
    %435 = vmatpush1.xpose.msra.mxu0 %v256
    %436 = vmatprep.subr.mxu0 0.0
    %437 = vmatpush1.xpose.msra.mxu0 %v259
    %438 = vmatprep.subr.mxu0 0.0
    %439 = vmatpush1.xpose.msra.mxu0 %v262
    %440 = vmatprep.subr.mxu0 0.0
    %441 = vmatpush1.xpose.msra.mxu0 %v265
    %442 = vmatprep.subr.mxu0 0.0
    %443 = vmatpush1.xpose.msra.mxu0 %v268
    %444 = vmatprep.subr.mxu0 0.0
    %445 = vmatpush1.xpose.msra.mxu0 %v271
    %446 = vmatprep.subr.mxu0 0.0
    %447 = vmatpush1.xpose.msra.mxu0 %v274
    %448 = vmatprep.subr.mxu0 0.0
    %449 = vmatpush1.xpose.msra.mxu0 %v277
    %450 = vmatprep.subr.mxu0 0.0
    %451 = vmatpush1.xpose.msra.mxu0 %v280
    %452 = vmatprep.subr.mxu0 0.0
    %453 = vmatpush1.xpose.msra.mxu0 %v283
    %454 = vmatprep.subr.mxu0 0.0
    %455 = vmatpush1.xpose.msra.mxu0 %v286
    %456 = vmatprep.subr.mxu0 0.0
    %457 = vmatpush1.xpose.msra.mxu0 %v289
    %458 = vmatprep.subr.mxu0 0.0
    %459 = vmatpush1.xpose.msra.mxu0 %v292
    %460 = vmatprep.subr.mxu0 0.0
    %461 = vmatpush1.xpose.msra.mxu0 %v295
    %462 = vmatprep.subr.mxu0 0.0
    %463 = vmatpush1.xpose.msra.mxu0 %v298
    %464 = vmatprep.subr.mxu0 0.0
    %465 = vmatpush1.xpose.msra.mxu0 %v301
    %466 = vmatprep.subr.mxu0 0.0
    %467 = vmatpush1.xpose.msra.mxu0 %v304
    %468 = vmatprep.subr.mxu0 0.0
    %469 = vmatpush1.xpose.msra.mxu0 %v307
    %470 = vmatprep.subr.mxu0 0.0
    %471 = vmatpush1.xpose.msra.mxu0 %v310
    %472 = vmatprep.subr.mxu0 0.0
    %473 = vmatpush1.xpose.msra.mxu0 %v313
    %474 = vmatprep.subr.mxu0 0.0
    %475 = vmatpush1.xpose.msra.mxu0 %v316
    %476 = vmatprep.subr.mxu0 0.0
    %477 = vmatpush1.xpose.msra.mxu0 %v319
    %478 = vmatprep.subr.mxu0 0.0
    %479 = vmatpush1.xpose.msra.mxu0 %v322
    %480 = vmatprep.subr.mxu0 0.0
    %481 = vmatpush1.xpose.msra.mxu0 %v325
    %482 = vmatprep.subr.mxu0 0.0
    %483 = vmatpush1.xpose.msra.mxu0 %v328
    %484 = vmatprep.subr.mxu0 0.0
    %485 = vmatpush1.xpose.msra.mxu0 %v331
    %486 = vmatprep.mubr.f32.mxu0 0.0
    %487 = vmatmul.mubr.f32.gmra.mrb[0].mxu0 %v130
    %v488 = vpop.f32.mrb[0].mxu0
    %v489 = vadd.f32 %v111, %v488
    %v490 = vpop.f32.mrb[0].mxu0
    %v491 = vadd.f32 %v111, %v490
    %492 = vmatprep.mubr.f32.mxu0 0.0
    %493 = vmatmul.mubr.f32.gmra.mrb[0].mxu0 %v133
    %v494 = vpop.f32.mrb[0].mxu0
    %v495 = vadd.f32 %v116, %v494
    %v496 = vpop.f32.mrb[0].mxu0
    %v497 = vadd.f32 %v116, %v496
    %498 = vmatprep.mubr.f32.mxu0 0.0
    %499 = vmatmul.mubr.f32.gmra.mrb[0].mxu0 %v136
    %v500 = vpop.f32.mrb[0].mxu0
    %v501 = vadd.f32 %v121, %v500
    %v502 = vpop.f32.mrb[0].mxu0
    %v503 = vadd.f32 %v121, %v502
    %504 = vmatprep.mubr.f32.mxu0 0.0
    %505 = vmatmul.mubr.f32.gmra.mrb[0].mxu0 %v139
    %v506 = vpop.f32.mrb[0].mxu0
    %v507 = vadd.f32 %v126, %v506
    %v508 = vpop.f32.mrb[0].mxu0
    %v509 = vadd.f32 %v126, %v508
    %510 = vdwg.mxu0
    %v511 = vxor.u32 %v400, 2147483648
    %v512 = vxor.u32 %v402, 2147483648
    %v513 = vxor.u32 %v489, 2147483648
    %v514 = vxor.u32 %v491, 2147483648
    %v515 = vxor.u32 %v406, 2147483648
    %v516 = vxor.u32 %v408, 2147483648
    %v517 = vxor.u32 %v495, 2147483648
    %v518 = vxor.u32 %v497, 2147483648
    %v519 = vxor.u32 %v412, 2147483648
    %v520 = vxor.u32 %v414, 2147483648
    %v521 = vxor.u32 %v501, 2147483648
    %v522 = vxor.u32 %v503, 2147483648
    %v523 = vxor.u32 %v418, 2147483648
    %v524 = vxor.u32 %v420, 2147483648
    %v525 = vxor.u32 %v507, 2147483648
    %v526 = vxor.u32 %v509, 2147483648
    %v527 = vmul.f32 %v511, 1.442695
    %v528 = vpow.pop %v527
    %v529 = vmul.f32 %v512, 1.442695
    %v530 = vpow.pop %v529
    %v531 = vmul.f32 %v513, 1.442695
    %v532 = vpow.pop %v531
    %v533 = vmul.f32 %v514, 1.442695
    %v534 = vpow.pop %v533
    %v535 = vmul.f32 %v515, 1.442695
    %v536 = vpow.pop %v535
    %v537 = vmul.f32 %v516, 1.442695
    %v538 = vpow.pop %v537
    %v539 = vmul.f32 %v517, 1.442695
    %v540 = vpow.pop %v539
    %v541 = vmul.f32 %v518, 1.442695
    %v542 = vpow.pop %v541
    %v543 = vmul.f32 %v519, 1.442695
    %v544 = vpow.pop %v543
    %v545 = vmul.f32 %v520, 1.442695
    %v546 = vpow.pop %v545
    %v547 = vmul.f32 %v521, 1.442695
    %v548 = vpow.pop %v547
    %v549 = vmul.f32 %v522, 1.442695
    %v550 = vpow.pop %v549
    %v551 = vmul.f32 %v523, 1.442695
    %v552 = vpow.pop %v551
    %v553 = vmul.f32 %v524, 1.442695
    %v554 = vpow.pop %v553
    %v555 = vmul.f32 %v525, 1.442695
    %v556 = vpow.pop %v555
    %v557 = vmul.f32 %v526, 1.442695
    %v558 = vpow.pop %v557
    %v559 = vadd.f32 %v528, 1.0
    %v560 = vadd.f32 %v530, 1.0
    %v561 = vadd.f32 %v532, 1.0
    %v562 = vadd.f32 %v534, 1.0
    %v563 = vadd.f32 %v536, 1.0
    %v564 = vadd.f32 %v538, 1.0
    %v565 = vadd.f32 %v540, 1.0
    %v566 = vadd.f32 %v542, 1.0
    %v567 = vadd.f32 %v544, 1.0
    %v568 = vadd.f32 %v546, 1.0
    %v569 = vadd.f32 %v548, 1.0
    %v570 = vadd.f32 %v550, 1.0
    %v571 = vadd.f32 %v552, 1.0
    %v572 = vadd.f32 %v554, 1.0
    %v573 = vadd.f32 %v556, 1.0
    %v574 = vadd.f32 %v558, 1.0
    %v575 = vrcp.pop %v559
    %v576 = vmul.f32 1.0, %v575
    %v577 = vrcp.pop %v560
    %v578 = vmul.f32 1.0, %v577
    %v579 = vrcp.pop %v561
    %v580 = vmul.f32 1.0, %v579
    %v581 = vrcp.pop %v562
    %v582 = vmul.f32 1.0, %v581
    %v583 = vrcp.pop %v563
    %v584 = vmul.f32 1.0, %v583
    %v585 = vrcp.pop %v564
    %v586 = vmul.f32 1.0, %v585
    %v587 = vrcp.pop %v565
    %v588 = vmul.f32 1.0, %v587
    %v589 = vrcp.pop %v566
    %v590 = vmul.f32 1.0, %v589
    %v591 = vrcp.pop %v567
    %v592 = vmul.f32 1.0, %v591
    %v593 = vrcp.pop %v568
    %v594 = vmul.f32 1.0, %v593
    %v595 = vrcp.pop %v569
    %v596 = vmul.f32 1.0, %v595
    %v597 = vrcp.pop %v570
    %v598 = vmul.f32 1.0, %v597
    %v599 = vrcp.pop %v571
    %v600 = vmul.f32 1.0, %v599
    %v601 = vrcp.pop %v572
    %v602 = vmul.f32 1.0, %v601
    %v603 = vrcp.pop %v573
    %v604 = vmul.f32 1.0, %v603
    %v605 = vrcp.pop %v574
    %v606 = vmul.f32 1.0, %v605
    %v607 = vld [vmem:[%s3] sm:$0xff]
    %v608 = vld [vmem:[%s3 + $0x8] sm:$0xff]
    %v609 = vld [vmem:[%s3 + $0x10] sm:$0xff]
    %v610 = vld [vmem:[%s3 + $0x18] sm:$0xff]
    %v611 = vld [vmem:[%s4] sm:$0xff]
    %v612 = vld [vmem:[%s4 + $0x8] sm:$0xff]
    %v613 = vld [vmem:[%s4 + $0x10] sm:$0xff]
    %v614 = vld [vmem:[%s4 + $0x18] sm:$0xff]
    %616 = vset.pattern.permute.xlu0 0
    %617 = vperm.xlu0 %616, %v611
    %v618 = vpop.permute.xlu0 %617
    %621 = vset.pattern.permute.xlu0 0
    %622 = vperm.xlu0 %621, %v612
    %v623 = vpop.permute.xlu0 %622
    %626 = vset.pattern.permute.xlu0 0
    %627 = vperm.xlu0 %626, %v613
    %v628 = vpop.permute.xlu0 %627
    %631 = vset.pattern.permute.xlu0 0
    %632 = vperm.xlu0 %631, %v614
    %v633 = vpop.permute.xlu0 %632
    %v636 = vsel %vm128, %v607, 0
    %v639 = vsel %vm128, %v608, 0
    %v642 = vsel %vm128, %v609, 0
    %v645 = vsel %vm128, %v610, 0
    %647 = vmatprep.subr.mxu0 %v578
    %648 = vmatpush1.msra.mxu0 %v576
    %649 = vmatprep.subr.mxu0 %v586
    %650 = vmatpush1.msra.mxu0 %v584
    %651 = vmatprep.subr.mxu0 %v594
    %652 = vmatpush1.msra.mxu0 %v592
    %653 = vmatprep.subr.mxu0 %v602
    %654 = vmatpush1.msra.mxu0 %v600
    %655 = vmatprep.subr.mxu0 0.0
    %656 = vmatpush1.msra.mxu0 0.0
    %657 = vmatprep.subr.mxu0 0.0
    %658 = vmatpush1.msra.mxu0 0.0
    %659 = vmatprep.subr.mxu0 0.0
    %660 = vmatpush1.msra.mxu0 0.0
    %661 = vmatprep.subr.mxu0 0.0
    %662 = vmatpush1.msra.mxu0 0.0
    %663 = vmatprep.subr.mxu0 0.0
    %664 = vmatpush1.msra.mxu0 0.0
    %665 = vmatprep.subr.mxu0 0.0
    %666 = vmatpush1.msra.mxu0 0.0
    %667 = vmatprep.subr.mxu0 0.0
    %668 = vmatpush1.msra.mxu0 0.0
    %669 = vmatprep.subr.mxu0 0.0
    %670 = vmatpush1.msra.mxu0 0.0
    %671 = vmatprep.subr.mxu0 0.0
    %672 = vmatpush1.msra.mxu0 0.0
    %673 = vmatprep.subr.mxu0 0.0
    %674 = vmatpush1.msra.mxu0 0.0
    %675 = vmatprep.subr.mxu0 0.0
    %676 = vmatpush1.msra.mxu0 0.0
    %677 = vmatprep.subr.mxu0 0.0
    %678 = vmatpush1.msra.mxu0 0.0
    %679 = vmatprep.subr.mxu0 0.0
    %680 = vmatpush1.msra.mxu0 0.0
    %681 = vmatprep.subr.mxu0 0.0
    %682 = vmatpush1.msra.mxu0 0.0
    %683 = vmatprep.subr.mxu0 0.0
    %684 = vmatpush1.msra.mxu0 0.0
    %685 = vmatprep.subr.mxu0 0.0
    %686 = vmatpush1.msra.mxu0 0.0
    %687 = vmatprep.subr.mxu0 0.0
    %688 = vmatpush1.msra.mxu0 0.0
    %689 = vmatprep.subr.mxu0 0.0
    %690 = vmatpush1.msra.mxu0 0.0
    %691 = vmatprep.subr.mxu0 0.0
    %692 = vmatpush1.msra.mxu0 0.0
    %693 = vmatprep.subr.mxu0 0.0
    %694 = vmatpush1.msra.mxu0 0.0
    %695 = vmatprep.subr.mxu0 0.0
    %696 = vmatpush1.msra.mxu0 0.0
    %697 = vmatprep.subr.mxu0 0.0
    %698 = vmatpush1.msra.mxu0 0.0
    %699 = vmatprep.subr.mxu0 0.0
    %700 = vmatpush1.msra.mxu0 0.0
    %701 = vmatprep.subr.mxu0 0.0
    %702 = vmatpush1.msra.mxu0 0.0
    %703 = vmatprep.subr.mxu0 0.0
    %704 = vmatpush1.msra.mxu0 0.0
    %705 = vmatprep.subr.mxu0 0.0
    %706 = vmatpush1.msra.mxu0 0.0
    %707 = vmatprep.subr.mxu0 0.0
    %708 = vmatpush1.msra.mxu0 0.0
    %709 = vmatprep.subr.mxu0 0.0
    %710 = vmatpush1.msra.mxu0 0.0
    %711 = vmatprep.mubr.f32.mxu0 0.0
    %712 = vmatmul.mubr.f32.gmra.mrb[0].mxu0 %v636
    %v713 = vpop.f32.mrb[0].mxu0
    %v714 = vadd.f32 %v618, %v713
    %v715 = vpop.f32.mrb[0].mxu0
    %v716 = vadd.f32 %v618, %v715
    %717 = vmatprep.mubr.f32.mxu0 0.0
    %718 = vmatmul.mubr.f32.gmra.mrb[0].mxu0 %v639
    %v719 = vpop.f32.mrb[0].mxu0
    %v720 = vadd.f32 %v623, %v719
    %v721 = vpop.f32.mrb[0].mxu0
    %v722 = vadd.f32 %v623, %v721
    %723 = vmatprep.mubr.f32.mxu0 0.0
    %724 = vmatmul.mubr.f32.gmra.mrb[0].mxu0 %v642
    %v725 = vpop.f32.mrb[0].mxu0
    %v726 = vadd.f32 %v628, %v725
    %v727 = vpop.f32.mrb[0].mxu0
    %v728 = vadd.f32 %v628, %v727
    %729 = vmatprep.mubr.f32.mxu0 0.0
    %730 = vmatmul.mubr.f32.gmra.mrb[0].mxu0 %v645
    %v731 = vpop.f32.mrb[0].mxu0
    %v732 = vadd.f32 %v633, %v731
    %v733 = vpop.f32.mrb[0].mxu0
    %v734 = vadd.f32 %v633, %v733
    %735 = vdwg.mxu0
    %736 = vmatprep.subr.mxu0 %v582
    %737 = vmatpush1.msra.mxu0 %v580
    %738 = vmatprep.subr.mxu0 %v590
    %739 = vmatpush1.msra.mxu0 %v588
    %740 = vmatprep.subr.mxu0 %v598
    %741 = vmatpush1.msra.mxu0 %v596
    %742 = vmatprep.subr.mxu0 %v606
    %743 = vmatpush1.msra.mxu0 %v604
    %744 = vmatprep.subr.mxu0 0.0
    %745 = vmatpush1.msra.mxu0 0.0
    %746 = vmatprep.subr.mxu0 0.0
    %747 = vmatpush1.msra.mxu0 0.0
    %748 = vmatprep.subr.mxu0 0.0
    %749 = vmatpush1.msra.mxu0 0.0
    %750 = vmatprep.subr.mxu0 0.0
    %751 = vmatpush1.msra.mxu0 0.0
    %752 = vmatprep.subr.mxu0 0.0
    %753 = vmatpush1.msra.mxu0 0.0
    %754 = vmatprep.subr.mxu0 0.0
    %755 = vmatpush1.msra.mxu0 0.0
    %756 = vmatprep.subr.mxu0 0.0
    %757 = vmatpush1.msra.mxu0 0.0
    %758 = vmatprep.subr.mxu0 0.0
    %759 = vmatpush1.msra.mxu0 0.0
    %760 = vmatprep.subr.mxu0 0.0
    %761 = vmatpush1.msra.mxu0 0.0
    %762 = vmatprep.subr.mxu0 0.0
    %763 = vmatpush1.msra.mxu0 0.0
    %764 = vmatprep.subr.mxu0 0.0
    %765 = vmatpush1.msra.mxu0 0.0
    %766 = vmatprep.subr.mxu0 0.0
    %767 = vmatpush1.msra.mxu0 0.0
    %768 = vmatprep.subr.mxu0 0.0
    %769 = vmatpush1.msra.mxu0 0.0
    %770 = vmatprep.subr.mxu0 0.0
    %771 = vmatpush1.msra.mxu0 0.0
    %772 = vmatprep.subr.mxu0 0.0
    %773 = vmatpush1.msra.mxu0 0.0
    %774 = vmatprep.subr.mxu0 0.0
    %775 = vmatpush1.msra.mxu0 0.0
    %776 = vmatprep.subr.mxu0 0.0
    %777 = vmatpush1.msra.mxu0 0.0
    %778 = vmatprep.subr.mxu0 0.0
    %779 = vmatpush1.msra.mxu0 0.0
    %780 = vmatprep.subr.mxu0 0.0
    %781 = vmatpush1.msra.mxu0 0.0
    %782 = vmatprep.subr.mxu0 0.0
    %783 = vmatpush1.msra.mxu0 0.0
    %784 = vmatprep.subr.mxu0 0.0
    %785 = vmatpush1.msra.mxu0 0.0
    %786 = vmatprep.subr.mxu0 0.0
    %787 = vmatpush1.msra.mxu0 0.0
    %788 = vmatprep.subr.mxu0 0.0
    %789 = vmatpush1.msra.mxu0 0.0
    %790 = vmatprep.subr.mxu0 0.0
    %791 = vmatpush1.msra.mxu0 0.0
    %792 = vmatprep.subr.mxu0 0.0
    %793 = vmatpush1.msra.mxu0 0.0
    %794 = vmatprep.subr.mxu0 0.0
    %795 = vmatpush1.msra.mxu0 0.0
    %796 = vmatprep.subr.mxu0 0.0
    %797 = vmatpush1.msra.mxu0 0.0
    %798 = vmatprep.subr.mxu0 0.0
    %799 = vmatpush1.msra.mxu0 0.0
    %800 = vmatprep.mubr.f32.mxu0 0.0
    %801 = vmatmul.mubr.f32.gmra.mrb[0].mxu0 %v636
    %v802 = vpop.f32.mrb[0].mxu0
    %v803 = vadd.f32 %v618, %v802
    %v804 = vpop.f32.mrb[0].mxu0
    %v805 = vadd.f32 %v618, %v804
    %806 = vmatprep.mubr.f32.mxu0 0.0
    %807 = vmatmul.mubr.f32.gmra.mrb[0].mxu0 %v639
    %v808 = vpop.f32.mrb[0].mxu0
    %v809 = vadd.f32 %v623, %v808
    %v810 = vpop.f32.mrb[0].mxu0
    %v811 = vadd.f32 %v623, %v810
    %812 = vmatprep.mubr.f32.mxu0 0.0
    %813 = vmatmul.mubr.f32.gmra.mrb[0].mxu0 %v642
    %v814 = vpop.f32.mrb[0].mxu0
    %v815 = vadd.f32 %v628, %v814
    %v816 = vpop.f32.mrb[0].mxu0
    %v817 = vadd.f32 %v628, %v816
    %818 = vmatprep.mubr.f32.mxu0 0.0
    %819 = vmatmul.mubr.f32.gmra.mrb[0].mxu0 %v645
    %v820 = vpop.f32.mrb[0].mxu0
    %v821 = vadd.f32 %v633, %v820
    %v822 = vpop.f32.mrb[0].mxu0
    %v823 = vadd.f32 %v633, %v822
    %824 = vdwg.mxu0
    %v825 = vxor.u32 %v714, 2147483648
    %v826 = vxor.u32 %v716, 2147483648
    %v827 = vxor.u32 %v803, 2147483648
    %v828 = vxor.u32 %v805, 2147483648
    %v829 = vxor.u32 %v720, 2147483648
    %v830 = vxor.u32 %v722, 2147483648
    %v831 = vxor.u32 %v809, 2147483648
    %v832 = vxor.u32 %v811, 2147483648
    %v833 = vxor.u32 %v726, 2147483648
    %v834 = vxor.u32 %v728, 2147483648
    %v835 = vxor.u32 %v815, 2147483648
    %v836 = vxor.u32 %v817, 2147483648
    %v837 = vxor.u32 %v732, 2147483648
    %v838 = vxor.u32 %v734, 2147483648
    %v839 = vxor.u32 %v821, 2147483648
    %v840 = vxor.u32 %v823, 2147483648
    %v841 = vmul.f32 %v825, 1.442695
    %v842 = vpow.pop %v841
    %v843 = vmul.f32 %v826, 1.442695
    %v844 = vpow.pop %v843
    %v845 = vmul.f32 %v827, 1.442695
    %v846 = vpow.pop %v845
    %v847 = vmul.f32 %v828, 1.442695
    %v848 = vpow.pop %v847
    %v849 = vmul.f32 %v829, 1.442695
    %v850 = vpow.pop %v849
    %v851 = vmul.f32 %v830, 1.442695
    %v852 = vpow.pop %v851
    %v853 = vmul.f32 %v831, 1.442695
    %v854 = vpow.pop %v853
    %v855 = vmul.f32 %v832, 1.442695
    %v856 = vpow.pop %v855
    %v857 = vmul.f32 %v833, 1.442695
    %v858 = vpow.pop %v857
    %v859 = vmul.f32 %v834, 1.442695
    %v860 = vpow.pop %v859
    %v861 = vmul.f32 %v835, 1.442695
    %v862 = vpow.pop %v861
    %v863 = vmul.f32 %v836, 1.442695
    %v864 = vpow.pop %v863
    %v865 = vmul.f32 %v837, 1.442695
    %v866 = vpow.pop %v865
    %v867 = vmul.f32 %v838, 1.442695
    %v868 = vpow.pop %v867
    %v869 = vmul.f32 %v839, 1.442695
    %v870 = vpow.pop %v869
    %v871 = vmul.f32 %v840, 1.442695
    %v872 = vpow.pop %v871
    %v873 = vadd.f32 %v842, 1.0
    %v874 = vadd.f32 %v844, 1.0
    %v875 = vadd.f32 %v846, 1.0
    %v876 = vadd.f32 %v848, 1.0
    %v877 = vadd.f32 %v850, 1.0
    %v878 = vadd.f32 %v852, 1.0
    %v879 = vadd.f32 %v854, 1.0
    %v880 = vadd.f32 %v856, 1.0
    %v881 = vadd.f32 %v858, 1.0
    %v882 = vadd.f32 %v860, 1.0
    %v883 = vadd.f32 %v862, 1.0
    %v884 = vadd.f32 %v864, 1.0
    %v885 = vadd.f32 %v866, 1.0
    %v886 = vadd.f32 %v868, 1.0
    %v887 = vadd.f32 %v870, 1.0
    %v888 = vadd.f32 %v872, 1.0
    %v889 = vrcp.pop %v873
    %v890 = vmul.f32 1.0, %v889
    %v891 = vrcp.pop %v874
    %v892 = vmul.f32 1.0, %v891
    %v893 = vrcp.pop %v875
    %v894 = vmul.f32 1.0, %v893
    %v895 = vrcp.pop %v876
    %v896 = vmul.f32 1.0, %v895
    %v897 = vrcp.pop %v877
    %v898 = vmul.f32 1.0, %v897
    %v899 = vrcp.pop %v878
    %v900 = vmul.f32 1.0, %v899
    %v901 = vrcp.pop %v879
    %v902 = vmul.f32 1.0, %v901
    %v903 = vrcp.pop %v880
    %v904 = vmul.f32 1.0, %v903
    %v905 = vrcp.pop %v881
    %v906 = vmul.f32 1.0, %v905
    %v907 = vrcp.pop %v882
    %v908 = vmul.f32 1.0, %v907
    %v909 = vrcp.pop %v883
    %v910 = vmul.f32 1.0, %v909
    %v911 = vrcp.pop %v884
    %v912 = vmul.f32 1.0, %v911
    %v913 = vrcp.pop %v885
    %v914 = vmul.f32 1.0, %v913
    %v915 = vrcp.pop %v886
    %v916 = vmul.f32 1.0, %v915
    %v917 = vrcp.pop %v887
    %v918 = vmul.f32 1.0, %v917
    %v919 = vrcp.pop %v888
    %v920 = vmul.f32 1.0, %v919
    %v921 = vld [vmem:[%s5] sm:$0xff]
    %v922 = vld [vmem:[%s5 + $0x8] sm:$0xff]
    %v923 = vld [vmem:[%s5 + $0x10] sm:$0xff]
    %v924 = vld [vmem:[%s5 + $0x18] sm:$0xff]
    %v925 = vld [vmem:[%s6] sm:$0xff]
    %v926 = vld [vmem:[%s6 + $0x8] sm:$0xff]
    %v927 = vld [vmem:[%s6 + $0x10] sm:$0xff]
    %v928 = vld [vmem:[%s6 + $0x18] sm:$0xff]
    %930 = vset.pattern.permute.xlu0 0
    %931 = vperm.xlu0 %930, %v925
    %v932 = vpop.permute.xlu0 %931
    %935 = vset.pattern.permute.xlu0 0
    %936 = vperm.xlu0 %935, %v926
    %v937 = vpop.permute.xlu0 %936
    %940 = vset.pattern.permute.xlu0 0
    %941 = vperm.xlu0 %940, %v927
    %v942 = vpop.permute.xlu0 %941
    %945 = vset.pattern.permute.xlu0 0
    %946 = vperm.xlu0 %945, %v928
    %v947 = vpop.permute.xlu0 %946
    %v950 = vsel %vm128, %v921, 0
    %v953 = vsel %vm128, %v922, 0
    %v956 = vsel %vm128, %v923, 0
    %v959 = vsel %vm128, %v924, 0
    %961 = vmatprep.subr.mxu0 %v892
    %962 = vmatpush1.msra.mxu0 %v890
    %963 = vmatprep.subr.mxu0 %v900
    %964 = vmatpush1.msra.mxu0 %v898
    %965 = vmatprep.subr.mxu0 %v908
    %966 = vmatpush1.msra.mxu0 %v906
    %967 = vmatprep.subr.mxu0 %v916
    %968 = vmatpush1.msra.mxu0 %v914
    %969 = vmatprep.subr.mxu0 0.0
    %970 = vmatpush1.msra.mxu0 0.0
    %971 = vmatprep.subr.mxu0 0.0
    %972 = vmatpush1.msra.mxu0 0.0
    %973 = vmatprep.subr.mxu0 0.0
    %974 = vmatpush1.msra.mxu0 0.0
    %975 = vmatprep.subr.mxu0 0.0
    %976 = vmatpush1.msra.mxu0 0.0
    %977 = vmatprep.subr.mxu0 0.0
    %978 = vmatpush1.msra.mxu0 0.0
    %979 = vmatprep.subr.mxu0 0.0
    %980 = vmatpush1.msra.mxu0 0.0
    %981 = vmatprep.subr.mxu0 0.0
    %982 = vmatpush1.msra.mxu0 0.0
    %983 = vmatprep.subr.mxu0 0.0
    %984 = vmatpush1.msra.mxu0 0.0
    %985 = vmatprep.subr.mxu0 0.0
    %986 = vmatpush1.msra.mxu0 0.0
    %987 = vmatprep.subr.mxu0 0.0
    %988 = vmatpush1.msra.mxu0 0.0
    %989 = vmatprep.subr.mxu0 0.0
    %990 = vmatpush1.msra.mxu0 0.0
    %991 = vmatprep.subr.mxu0 0.0
    %992 = vmatpush1.msra.mxu0 0.0
    %993 = vmatprep.subr.mxu0 0.0
    %994 = vmatpush1.msra.mxu0 0.0
    %995 = vmatprep.subr.mxu0 0.0
    %996 = vmatpush1.msra.mxu0 0.0
    %997 = vmatprep.subr.mxu0 0.0
    %998 = vmatpush1.msra.mxu0 0.0
    %999 = vmatprep.subr.mxu0 0.0
    %1000 = vmatpush1.msra.mxu0 0.0
    %1001 = vmatprep.subr.mxu0 0.0
    %1002 = vmatpush1.msra.mxu0 0.0
    %1003 = vmatprep.subr.mxu0 0.0
    %1004 = vmatpush1.msra.mxu0 0.0
    %1005 = vmatprep.subr.mxu0 0.0
    %1006 = vmatpush1.msra.mxu0 0.0
    %1007 = vmatprep.subr.mxu0 0.0
    %1008 = vmatpush1.msra.mxu0 0.0
    %1009 = vmatprep.subr.mxu0 0.0
    %1010 = vmatpush1.msra.mxu0 0.0
    %1011 = vmatprep.subr.mxu0 0.0
    %1012 = vmatpush1.msra.mxu0 0.0
    %1013 = vmatprep.subr.mxu0 0.0
    %1014 = vmatpush1.msra.mxu0 0.0
    %1015 = vmatprep.subr.mxu0 0.0
    %1016 = vmatpush1.msra.mxu0 0.0
    %1017 = vmatprep.subr.mxu0 0.0
    %1018 = vmatpush1.msra.mxu0 0.0
    %1019 = vmatprep.subr.mxu0 0.0
    %1020 = vmatpush1.msra.mxu0 0.0
    %1021 = vmatprep.subr.mxu0 0.0
    %1022 = vmatpush1.msra.mxu0 0.0
    %1023 = vmatprep.subr.mxu0 0.0
    %1024 = vmatpush1.msra.mxu0 0.0
    %1025 = vmatprep.mubr.f32.mxu0 0.0
    %1026 = vmatmul.mubr.f32.gmra.mrb[0].mxu0 %v950
    %v1027 = vpop.f32.mrb[0].mxu0
    %v1028 = vadd.f32 %v932, %v1027
    %v1029 = vpop.f32.mrb[0].mxu0
    %v1030 = vadd.f32 %v932, %v1029
    %1031 = vmatprep.mubr.f32.mxu0 0.0
    %1032 = vmatmul.mubr.f32.gmra.mrb[0].mxu0 %v953
    %v1033 = vpop.f32.mrb[0].mxu0
    %v1034 = vadd.f32 %v937, %v1033
    %v1035 = vpop.f32.mrb[0].mxu0
    %v1036 = vadd.f32 %v937, %v1035
    %1037 = vmatprep.mubr.f32.mxu0 0.0
    %1038 = vmatmul.mubr.f32.gmra.mrb[0].mxu0 %v956
    %v1039 = vpop.f32.mrb[0].mxu0
    %v1040 = vadd.f32 %v942, %v1039
    %v1041 = vpop.f32.mrb[0].mxu0
    %v1042 = vadd.f32 %v942, %v1041
    %1043 = vmatprep.mubr.f32.mxu0 0.0
    %1044 = vmatmul.mubr.f32.gmra.mrb[0].mxu0 %v959
    %v1045 = vpop.f32.mrb[0].mxu0
    %v1046 = vadd.f32 %v947, %v1045
    %v1047 = vpop.f32.mrb[0].mxu0
    %v1048 = vadd.f32 %v947, %v1047
    %1049 = vdwg.mxu0
    %1050 = vmatprep.subr.mxu0 %v896
    %1051 = vmatpush1.msra.mxu0 %v894
    %1052 = vmatprep.subr.mxu0 %v904
    %1053 = vmatpush1.msra.mxu0 %v902
    %1054 = vmatprep.subr.mxu0 %v912
    %1055 = vmatpush1.msra.mxu0 %v910
    %1056 = vmatprep.subr.mxu0 %v920
    %1057 = vmatpush1.msra.mxu0 %v918
    %1058 = vmatprep.subr.mxu0 0.0
    %1059 = vmatpush1.msra.mxu0 0.0
    %1060 = vmatprep.subr.mxu0 0.0
    %1061 = vmatpush1.msra.mxu0 0.0
    %1062 = vmatprep.subr.mxu0 0.0
    %1063 = vmatpush1.msra.mxu0 0.0
    %1064 = vmatprep.subr.mxu0 0.0
    %1065 = vmatpush1.msra.mxu0 0.0
    %1066 = vmatprep.subr.mxu0 0.0
    %1067 = vmatpush1.msra.mxu0 0.0
    %1068 = vmatprep.subr.mxu0 0.0
    %1069 = vmatpush1.msra.mxu0 0.0
    %1070 = vmatprep.subr.mxu0 0.0
    %1071 = vmatpush1.msra.mxu0 0.0
    %1072 = vmatprep.subr.mxu0 0.0
    %1073 = vmatpush1.msra.mxu0 0.0
    %1074 = vmatprep.subr.mxu0 0.0
    %1075 = vmatpush1.msra.mxu0 0.0
    %1076 = vmatprep.subr.mxu0 0.0
    %1077 = vmatpush1.msra.mxu0 0.0
    %1078 = vmatprep.subr.mxu0 0.0
    %1079 = vmatpush1.msra.mxu0 0.0
    %1080 = vmatprep.subr.mxu0 0.0
    %1081 = vmatpush1.msra.mxu0 0.0
    %1082 = vmatprep.subr.mxu0 0.0
    %1083 = vmatpush1.msra.mxu0 0.0
    %1084 = vmatprep.subr.mxu0 0.0
    %1085 = vmatpush1.msra.mxu0 0.0
    %1086 = vmatprep.subr.mxu0 0.0
    %1087 = vmatpush1.msra.mxu0 0.0
    %1088 = vmatprep.subr.mxu0 0.0
    %1089 = vmatpush1.msra.mxu0 0.0
    %1090 = vmatprep.subr.mxu0 0.0
    %1091 = vmatpush1.msra.mxu0 0.0
    %1092 = vmatprep.subr.mxu0 0.0
    %1093 = vmatpush1.msra.mxu0 0.0
    %1094 = vmatprep.subr.mxu0 0.0
    %1095 = vmatpush1.msra.mxu0 0.0
    %1096 = vmatprep.subr.mxu0 0.0
    %1097 = vmatpush1.msra.mxu0 0.0
    %1098 = vmatprep.subr.mxu0 0.0
    %1099 = vmatpush1.msra.mxu0 0.0
    %1100 = vmatprep.subr.mxu0 0.0
    %1101 = vmatpush1.msra.mxu0 0.0
    %1102 = vmatprep.subr.mxu0 0.0
    %1103 = vmatpush1.msra.mxu0 0.0
    %1104 = vmatprep.subr.mxu0 0.0
    %1105 = vmatpush1.msra.mxu0 0.0
    %1106 = vmatprep.subr.mxu0 0.0
    %1107 = vmatpush1.msra.mxu0 0.0
    %1108 = vmatprep.subr.mxu0 0.0
    %1109 = vmatpush1.msra.mxu0 0.0
    %1110 = vmatprep.subr.mxu0 0.0
    %1111 = vmatpush1.msra.mxu0 0.0
    %1112 = vmatprep.subr.mxu0 0.0
    %1113 = vmatpush1.msra.mxu0 0.0
    %1114 = vmatprep.mubr.f32.mxu0 0.0
    %1115 = vmatmul.mubr.f32.gmra.mrb[0].mxu0 %v950
    %v1116 = vpop.f32.mrb[0].mxu0
    %v1117 = vadd.f32 %v932, %v1116
    %v1118 = vpop.f32.mrb[0].mxu0
    %v1119 = vadd.f32 %v932, %v1118
    %1120 = vmatprep.mubr.f32.mxu0 0.0
    %1121 = vmatmul.mubr.f32.gmra.mrb[0].mxu0 %v953
    %v1122 = vpop.f32.mrb[0].mxu0
    %v1123 = vadd.f32 %v937, %v1122
    %v1124 = vpop.f32.mrb[0].mxu0
    %v1125 = vadd.f32 %v937, %v1124
    %1126 = vmatprep.mubr.f32.mxu0 0.0
    %1127 = vmatmul.mubr.f32.gmra.mrb[0].mxu0 %v956
    %v1128 = vpop.f32.mrb[0].mxu0
    %v1129 = vadd.f32 %v942, %v1128
    %v1130 = vpop.f32.mrb[0].mxu0
    %v1131 = vadd.f32 %v942, %v1130
    %1132 = vmatprep.mubr.f32.mxu0 0.0
    %1133 = vmatmul.mubr.f32.gmra.mrb[0].mxu0 %v959
    %v1134 = vpop.f32.mrb[0].mxu0
    %v1135 = vadd.f32 %v947, %v1134
    %v1136 = vpop.f32.mrb[0].mxu0
    %v1137 = vadd.f32 %v947, %v1136
    %1138 = vdwg.mxu0
    %v1139 = vxor.u32 %v1028, 2147483648
    %v1140 = vxor.u32 %v1030, 2147483648
    %v1141 = vxor.u32 %v1117, 2147483648
    %v1142 = vxor.u32 %v1119, 2147483648
    %v1143 = vxor.u32 %v1034, 2147483648
    %v1144 = vxor.u32 %v1036, 2147483648
    %v1145 = vxor.u32 %v1123, 2147483648
    %v1146 = vxor.u32 %v1125, 2147483648
    %v1147 = vxor.u32 %v1040, 2147483648
    %v1148 = vxor.u32 %v1042, 2147483648
    %v1149 = vxor.u32 %v1129, 2147483648
    %v1150 = vxor.u32 %v1131, 2147483648
    %v1151 = vxor.u32 %v1046, 2147483648
    %v1152 = vxor.u32 %v1048, 2147483648
    %v1153 = vxor.u32 %v1135, 2147483648
    %v1154 = vxor.u32 %v1137, 2147483648
    %v1155 = vmul.f32 %v1139, 1.442695
    %v1156 = vpow.pop %v1155
    %v1157 = vmul.f32 %v1140, 1.442695
    %v1158 = vpow.pop %v1157
    %v1159 = vmul.f32 %v1141, 1.442695
    %v1160 = vpow.pop %v1159
    %v1161 = vmul.f32 %v1142, 1.442695
    %v1162 = vpow.pop %v1161
    %v1163 = vmul.f32 %v1143, 1.442695
    %v1164 = vpow.pop %v1163
    %v1165 = vmul.f32 %v1144, 1.442695
    %v1166 = vpow.pop %v1165
    %v1167 = vmul.f32 %v1145, 1.442695
    %v1168 = vpow.pop %v1167
    %v1169 = vmul.f32 %v1146, 1.442695
    %v1170 = vpow.pop %v1169
    %v1171 = vmul.f32 %v1147, 1.442695
    %v1172 = vpow.pop %v1171
    %v1173 = vmul.f32 %v1148, 1.442695
    %v1174 = vpow.pop %v1173
    %v1175 = vmul.f32 %v1149, 1.442695
    %v1176 = vpow.pop %v1175
    %v1177 = vmul.f32 %v1150, 1.442695
    %v1178 = vpow.pop %v1177
    %v1179 = vmul.f32 %v1151, 1.442695
    %v1180 = vpow.pop %v1179
    %v1181 = vmul.f32 %v1152, 1.442695
    %v1182 = vpow.pop %v1181
    %v1183 = vmul.f32 %v1153, 1.442695
    %v1184 = vpow.pop %v1183
    %v1185 = vmul.f32 %v1154, 1.442695
    %v1186 = vpow.pop %v1185
    %v1187 = vadd.f32 %v1156, 1.0
    %v1188 = vadd.f32 %v1158, 1.0
    %v1189 = vadd.f32 %v1160, 1.0
    %v1190 = vadd.f32 %v1162, 1.0
    %v1191 = vadd.f32 %v1164, 1.0
    %v1192 = vadd.f32 %v1166, 1.0
    %v1193 = vadd.f32 %v1168, 1.0
    %v1194 = vadd.f32 %v1170, 1.0
    %v1195 = vadd.f32 %v1172, 1.0
    %v1196 = vadd.f32 %v1174, 1.0
    %v1197 = vadd.f32 %v1176, 1.0
    %v1198 = vadd.f32 %v1178, 1.0
    %v1199 = vadd.f32 %v1180, 1.0
    %v1200 = vadd.f32 %v1182, 1.0
    %v1201 = vadd.f32 %v1184, 1.0
    %v1202 = vadd.f32 %v1186, 1.0
    %v1203 = vrcp.pop %v1187
    %v1204 = vmul.f32 1.0, %v1203
    %v1205 = vrcp.pop %v1188
    %v1206 = vmul.f32 1.0, %v1205
    %v1207 = vrcp.pop %v1189
    %v1208 = vmul.f32 1.0, %v1207
    %v1209 = vrcp.pop %v1190
    %v1210 = vmul.f32 1.0, %v1209
    %v1211 = vrcp.pop %v1191
    %v1212 = vmul.f32 1.0, %v1211
    %v1213 = vrcp.pop %v1192
    %v1214 = vmul.f32 1.0, %v1213
    %v1215 = vrcp.pop %v1193
    %v1216 = vmul.f32 1.0, %v1215
    %v1217 = vrcp.pop %v1194
    %v1218 = vmul.f32 1.0, %v1217
    %v1219 = vrcp.pop %v1195
    %v1220 = vmul.f32 1.0, %v1219
    %v1221 = vrcp.pop %v1196
    %v1222 = vmul.f32 1.0, %v1221
    %v1223 = vrcp.pop %v1197
    %v1224 = vmul.f32 1.0, %v1223
    %v1225 = vrcp.pop %v1198
    %v1226 = vmul.f32 1.0, %v1225
    %v1227 = vrcp.pop %v1199
    %v1228 = vmul.f32 1.0, %v1227
    %v1229 = vrcp.pop %v1200
    %v1230 = vmul.f32 1.0, %v1229
    %v1231 = vrcp.pop %v1201
    %v1232 = vmul.f32 1.0, %v1231
    %v1233 = vrcp.pop %v1202
    %v1234 = vmul.f32 1.0, %v1233
    %v1235 = vld [vmem:[%s8] sm:$0xff]
    %v1236 = vld [vmem:[%s7] sm:$0xff]
    %v1238 = vsel %vm128, %v1236, 0
    %1240 = vmatprep.subr.mxu0 %v1206
    %1241 = vmatpush1.msra.mxu0 %v1204
    %1242 = vmatprep.subr.mxu0 %v1214
    %1243 = vmatpush1.msra.mxu0 %v1212
    %1244 = vmatprep.subr.mxu0 %v1222
    %1245 = vmatpush1.msra.mxu0 %v1220
    %1246 = vmatprep.subr.mxu0 %v1230
    %1247 = vmatpush1.msra.mxu0 %v1228
    %1248 = vmatprep.subr.mxu0 0.0
    %1249 = vmatpush1.msra.mxu0 0.0
    %1250 = vmatprep.subr.mxu0 0.0
    %1251 = vmatpush1.msra.mxu0 0.0
    %1252 = vmatprep.subr.mxu0 0.0
    %1253 = vmatpush1.msra.mxu0 0.0
    %1254 = vmatprep.subr.mxu0 0.0
    %1255 = vmatpush1.msra.mxu0 0.0
    %1256 = vmatprep.subr.mxu0 0.0
    %1257 = vmatpush1.msra.mxu0 0.0
    %1258 = vmatprep.subr.mxu0 0.0
    %1259 = vmatpush1.msra.mxu0 0.0
    %1260 = vmatprep.subr.mxu0 0.0
    %1261 = vmatpush1.msra.mxu0 0.0
    %1262 = vmatprep.subr.mxu0 0.0
    %1263 = vmatpush1.msra.mxu0 0.0
    %1264 = vmatprep.subr.mxu0 0.0
    %1265 = vmatpush1.msra.mxu0 0.0
    %1266 = vmatprep.subr.mxu0 0.0
    %1267 = vmatpush1.msra.mxu0 0.0
    %1268 = vmatprep.subr.mxu0 0.0
    %1269 = vmatpush1.msra.mxu0 0.0
    %1270 = vmatprep.subr.mxu0 0.0
    %1271 = vmatpush1.msra.mxu0 0.0
    %1272 = vmatprep.subr.mxu0 0.0
    %1273 = vmatpush1.msra.mxu0 0.0
    %1274 = vmatprep.subr.mxu0 0.0
    %1275 = vmatpush1.msra.mxu0 0.0
    %1276 = vmatprep.subr.mxu0 0.0
    %1277 = vmatpush1.msra.mxu0 0.0
    %1278 = vmatprep.subr.mxu0 0.0
    %1279 = vmatpush1.msra.mxu0 0.0
    %1280 = vmatprep.subr.mxu0 0.0
    %1281 = vmatpush1.msra.mxu0 0.0
    %1282 = vmatprep.subr.mxu0 0.0
    %1283 = vmatpush1.msra.mxu0 0.0
    %1284 = vmatprep.subr.mxu0 0.0
    %1285 = vmatpush1.msra.mxu0 0.0
    %1286 = vmatprep.subr.mxu0 0.0
    %1287 = vmatpush1.msra.mxu0 0.0
    %1288 = vmatprep.subr.mxu0 0.0
    %1289 = vmatpush1.msra.mxu0 0.0
    %1290 = vmatprep.subr.mxu0 0.0
    %1291 = vmatpush1.msra.mxu0 0.0
    %1292 = vmatprep.subr.mxu0 0.0
    %1293 = vmatpush1.msra.mxu0 0.0
    %1294 = vmatprep.subr.mxu0 0.0
    %1295 = vmatpush1.msra.mxu0 0.0
    %1296 = vmatprep.subr.mxu0 0.0
    %1297 = vmatpush1.msra.mxu0 0.0
    %1298 = vmatprep.subr.mxu0 0.0
    %1299 = vmatpush1.msra.mxu0 0.0
    %1300 = vmatprep.subr.mxu0 0.0
    %1301 = vmatpush1.msra.mxu0 0.0
    %1302 = vmatprep.subr.mxu0 0.0
    %1303 = vmatpush1.msra.mxu0 0.0
    %1304 = vmatprep.mubr.f32.mxu0 0.0
    %1305 = vmatmul.mubr.f32.gmra.mrb[0].mxu0 %v1238
    %v1306 = vpop.f32.mrb[0].mxu0
    %v1307 = vadd.f32 0.0, %v1306
    %v1308 = vpop.f32.mrb[0].mxu0
    %v1309 = vadd.f32 0.0, %v1308
    %1310 = vdwg.mxu0
    %1311 = vmatprep.subr.mxu0 %v1210
    %1312 = vmatpush1.msra.mxu0 %v1208
    %1313 = vmatprep.subr.mxu0 %v1218
    %1314 = vmatpush1.msra.mxu0 %v1216
    %1315 = vmatprep.subr.mxu0 %v1226
    %1316 = vmatpush1.msra.mxu0 %v1224
    %1317 = vmatprep.subr.mxu0 %v1234
    %1318 = vmatpush1.msra.mxu0 %v1232
    %1319 = vmatprep.subr.mxu0 0.0
    %1320 = vmatpush1.msra.mxu0 0.0
    %1321 = vmatprep.subr.mxu0 0.0
    %1322 = vmatpush1.msra.mxu0 0.0
    %1323 = vmatprep.subr.mxu0 0.0
    %1324 = vmatpush1.msra.mxu0 0.0
    %1325 = vmatprep.subr.mxu0 0.0
    %1326 = vmatpush1.msra.mxu0 0.0
    %1327 = vmatprep.subr.mxu0 0.0
    %1328 = vmatpush1.msra.mxu0 0.0
    %1329 = vmatprep.subr.mxu0 0.0
    %1330 = vmatpush1.msra.mxu0 0.0
    %1331 = vmatprep.subr.mxu0 0.0
    %1332 = vmatpush1.msra.mxu0 0.0
    %1333 = vmatprep.subr.mxu0 0.0
    %1334 = vmatpush1.msra.mxu0 0.0
    %1335 = vmatprep.subr.mxu0 0.0
    %1336 = vmatpush1.msra.mxu0 0.0
    %1337 = vmatprep.subr.mxu0 0.0
    %1338 = vmatpush1.msra.mxu0 0.0
    %1339 = vmatprep.subr.mxu0 0.0
    %1340 = vmatpush1.msra.mxu0 0.0
    %1341 = vmatprep.subr.mxu0 0.0
    %1342 = vmatpush1.msra.mxu0 0.0
    %1343 = vmatprep.subr.mxu0 0.0
    %1344 = vmatpush1.msra.mxu0 0.0
    %1345 = vmatprep.subr.mxu0 0.0
    %1346 = vmatpush1.msra.mxu0 0.0
    %1347 = vmatprep.subr.mxu0 0.0
    %1348 = vmatpush1.msra.mxu0 0.0
    %1349 = vmatprep.subr.mxu0 0.0
    %1350 = vmatpush1.msra.mxu0 0.0
    %1351 = vmatprep.subr.mxu0 0.0
    %1352 = vmatpush1.msra.mxu0 0.0
    %1353 = vmatprep.subr.mxu0 0.0
    %1354 = vmatpush1.msra.mxu0 0.0
    %1355 = vmatprep.subr.mxu0 0.0
    %1356 = vmatpush1.msra.mxu0 0.0
    %1357 = vmatprep.subr.mxu0 0.0
    %1358 = vmatpush1.msra.mxu0 0.0
    %1359 = vmatprep.subr.mxu0 0.0
    %1360 = vmatpush1.msra.mxu0 0.0
    %1361 = vmatprep.subr.mxu0 0.0
    %1362 = vmatpush1.msra.mxu0 0.0
    %1363 = vmatprep.subr.mxu0 0.0
    %1364 = vmatpush1.msra.mxu0 0.0
    %1365 = vmatprep.subr.mxu0 0.0
    %1366 = vmatpush1.msra.mxu0 0.0
    %1367 = vmatprep.subr.mxu0 0.0
    %1368 = vmatpush1.msra.mxu0 0.0
    %1369 = vmatprep.subr.mxu0 0.0
    %1370 = vmatpush1.msra.mxu0 0.0
    %1371 = vmatprep.subr.mxu0 0.0
    %1372 = vmatpush1.msra.mxu0 0.0
    %1373 = vmatprep.subr.mxu0 0.0
    %1374 = vmatpush1.msra.mxu0 0.0
    %1375 = vmatprep.mubr.f32.mxu0 0.0
    %1376 = vmatmul.mubr.f32.gmra.mrb[0].mxu0 %v1238
    %v1377 = vpop.f32.mrb[0].mxu0
    %v1378 = vadd.f32 0.0, %v1377
    %v1379 = vpop.f32.mrb[0].mxu0
    %v1380 = vadd.f32 0.0, %v1379
    %1381 = vdwg.mxu0
    %1383 = vset.pattern.permute.xlu0 0
    %1384 = vperm.xlu0 %1383, %v1235
    %v1385 = vpop.permute.xlu0 %1384
    %v1387 = vsub.f32 %v1385, %v1307
    %v1388 = vsub.f32 %v1385, %v1309
    %v1389 = vsub.f32 %v1385, %v1378
    %v1390 = vsub.f32 %v1385, %v1380
    %v1391 = vand.u32 2147483647, %v1387
    %v1392 = vand.u32 2147483647, %v1388
    %v1393 = vand.u32 2147483647, %v1389
    %v1394 = vand.u32 2147483647, %v1390
    %v1395 = vsub.f32 0.0, %v1391
    %v1396 = vsub.f32 0.0, %v1392
    %v1397 = vsub.f32 0.0, %v1393
    %v1398 = vsub.f32 0.0, %v1394
    %v1399 = vmul.f32 %v1395, 1.442695
    %v1400 = vpow.pop %v1399
    %v1401 = vmul.f32 %v1396, 1.442695
    %v1402 = vpow.pop %v1401
    %v1403 = vmul.f32 %v1397, 1.442695
    %v1404 = vpow.pop %v1403
    %v1405 = vmul.f32 %v1398, 1.442695
    %v1406 = vpow.pop %v1405
    %v1407 = vadd.f32 %v1400, 1.0
    %v1408 = vadd.f32 %v1402, 1.0
    %v1409 = vadd.f32 %v1404, 1.0
    %v1410 = vadd.f32 %v1406, 1.0
    %v1411 = vlog2.pop %v1407
    %v1412 = vmul.f32 %v1411, 0.6931472
    %v1413 = vlog2.pop %v1408
    %v1414 = vmul.f32 %v1413, 0.6931472
    %v1415 = vlog2.pop %v1409
    %v1416 = vmul.f32 %v1415, 0.6931472
    %v1417 = vlog2.pop %v1410
    %v1418 = vmul.f32 %v1417, 0.6931472
    %v1419 = vmax.f32 %v1387, 0.0
    %v1420 = vmax.f32 %v1388, 0.0
    %v1421 = vmax.f32 %v1389, 0.0
    %v1422 = vmax.f32 %v1390, 0.0
    %v1423 = vadd.f32 %v1419, %v1412
    %v1424 = vadd.f32 %v1420, %v1414
    %v1425 = vadd.f32 %v1421, %v1416
    %v1426 = vadd.f32 %v1422, %v1418
    %v1427 = vsub.f32 0.0, %v1423
    %v1428 = vsub.f32 0.0, %v1424
    %v1429 = vsub.f32 0.0, %v1425
    %v1430 = vsub.f32 0.0, %v1426
    %v1431 = vsub.f32 0.0, %v1387
    %v1432 = vsub.f32 0.0, %v1388
    %v1433 = vsub.f32 0.0, %v1389
    %v1434 = vsub.f32 0.0, %v1390
    %v1435 = vmax.f32 %v1431, 0.0
    %v1436 = vmax.f32 %v1432, 0.0
    %v1437 = vmax.f32 %v1433, 0.0
    %v1438 = vmax.f32 %v1434, 0.0
    %v1439 = vadd.f32 %v1435, %v1412
    %v1440 = vadd.f32 %v1436, %v1414
    %v1441 = vadd.f32 %v1437, %v1416
    %v1442 = vadd.f32 %v1438, %v1418
    %v1443 = vsub.f32 0.0, %v1439
    %v1444 = vsub.f32 0.0, %v1440
    %v1445 = vsub.f32 0.0, %v1441
    %v1446 = vsub.f32 0.0, %v1442
    %v1447 = vld [vmem:[%s9] sm:$0xff]
    %vm1448 = vcmask 64512
    %v1450 = vsel %vm1448, %v1447, 0
    %1452 = vmatprep.subr.mxu0 %v1428
    %1453 = vmatpush1.msra.mxu0 %v1427
    %1454 = vmatprep.subr.mxu0 0.0
    %1455 = vmatpush1.msra.mxu0 0.0
    %1456 = vmatprep.subr.mxu0 0.0
    %1457 = vmatpush1.msra.mxu0 0.0
    %1458 = vmatprep.subr.mxu0 0.0
    %1459 = vmatpush1.msra.mxu0 0.0
    %1460 = vmatprep.subr.mxu0 0.0
    %1461 = vmatpush1.msra.mxu0 0.0
    %1462 = vmatprep.subr.mxu0 0.0
    %1463 = vmatpush1.msra.mxu0 0.0
    %1464 = vmatprep.subr.mxu0 0.0
    %1465 = vmatpush1.msra.mxu0 0.0
    %1466 = vmatprep.subr.mxu0 0.0
    %1467 = vmatpush1.msra.mxu0 0.0
    %1468 = vmatprep.subr.mxu0 0.0
    %1469 = vmatpush1.msra.mxu0 0.0
    %1470 = vmatprep.subr.mxu0 0.0
    %1471 = vmatpush1.msra.mxu0 0.0
    %1472 = vmatprep.subr.mxu0 0.0
    %1473 = vmatpush1.msra.mxu0 0.0
    %1474 = vmatprep.subr.mxu0 0.0
    %1475 = vmatpush1.msra.mxu0 0.0
    %1476 = vmatprep.subr.mxu0 0.0
    %1477 = vmatpush1.msra.mxu0 0.0
    %1478 = vmatprep.subr.mxu0 0.0
    %1479 = vmatpush1.msra.mxu0 0.0
    %1480 = vmatprep.subr.mxu0 0.0
    %1481 = vmatpush1.msra.mxu0 0.0
    %1482 = vmatprep.subr.mxu0 0.0
    %1483 = vmatpush1.msra.mxu0 0.0
    %1484 = vmatprep.subr.mxu0 0.0
    %1485 = vmatpush1.msra.mxu0 0.0
    %1486 = vmatprep.subr.mxu0 0.0
    %1487 = vmatpush1.msra.mxu0 0.0
    %1488 = vmatprep.subr.mxu0 0.0
    %1489 = vmatpush1.msra.mxu0 0.0
    %1490 = vmatprep.subr.mxu0 0.0
    %1491 = vmatpush1.msra.mxu0 0.0
    %1492 = vmatprep.subr.mxu0 0.0
    %1493 = vmatpush1.msra.mxu0 0.0
    %1494 = vmatprep.subr.mxu0 0.0
    %1495 = vmatpush1.msra.mxu0 0.0
    %1496 = vmatprep.subr.mxu0 0.0
    %1497 = vmatpush1.msra.mxu0 0.0
    %1498 = vmatprep.subr.mxu0 0.0
    %1499 = vmatpush1.msra.mxu0 0.0
    %1500 = vmatprep.subr.mxu0 0.0
    %1501 = vmatpush1.msra.mxu0 0.0
    %1502 = vmatprep.subr.mxu0 0.0
    %1503 = vmatpush1.msra.mxu0 0.0
    %1504 = vmatprep.subr.mxu0 0.0
    %1505 = vmatpush1.msra.mxu0 0.0
    %1506 = vmatprep.subr.mxu0 0.0
    %1507 = vmatpush1.msra.mxu0 0.0
    %1508 = vmatprep.subr.mxu0 0.0
    %1509 = vmatpush1.msra.mxu0 0.0
    %1510 = vmatprep.subr.mxu0 0.0
    %1511 = vmatpush1.msra.mxu0 0.0
    %1512 = vmatprep.subr.mxu0 0.0
    %1513 = vmatpush1.msra.mxu0 0.0
    %1514 = vmatprep.subr.mxu0 0.0
    %1515 = vmatpush1.msra.mxu0 0.0
    %1516 = vmatprep.mubr.f32.mxu0 0.0
    %1517 = vmatmul.mubr.f32.gmra.mrb[0].mxu0 %v1450
    %v1518 = vpop.f32.mrb[0].mxu0
    %v1519 = vadd.f32 0.0, %v1518
    %v1520 = vpop.f32.mrb[0].mxu0
    %v1521 = vadd.f32 0.0, %v1520
    %1522 = vdwg.mxu0
    %1523 = vmatprep.subr.mxu0 %v1430
    %1524 = vmatpush1.msra.mxu0 %v1429
    %1525 = vmatprep.subr.mxu0 0.0
    %1526 = vmatpush1.msra.mxu0 0.0
    %1527 = vmatprep.subr.mxu0 0.0
    %1528 = vmatpush1.msra.mxu0 0.0
    %1529 = vmatprep.subr.mxu0 0.0
    %1530 = vmatpush1.msra.mxu0 0.0
    %1531 = vmatprep.subr.mxu0 0.0
    %1532 = vmatpush1.msra.mxu0 0.0
    %1533 = vmatprep.subr.mxu0 0.0
    %1534 = vmatpush1.msra.mxu0 0.0
    %1535 = vmatprep.subr.mxu0 0.0
    %1536 = vmatpush1.msra.mxu0 0.0
    %1537 = vmatprep.subr.mxu0 0.0
    %1538 = vmatpush1.msra.mxu0 0.0
    %1539 = vmatprep.subr.mxu0 0.0
    %1540 = vmatpush1.msra.mxu0 0.0
    %1541 = vmatprep.subr.mxu0 0.0
    %1542 = vmatpush1.msra.mxu0 0.0
    %1543 = vmatprep.subr.mxu0 0.0
    %1544 = vmatpush1.msra.mxu0 0.0
    %1545 = vmatprep.subr.mxu0 0.0
    %1546 = vmatpush1.msra.mxu0 0.0
    %1547 = vmatprep.subr.mxu0 0.0
    %1548 = vmatpush1.msra.mxu0 0.0
    %1549 = vmatprep.subr.mxu0 0.0
    %1550 = vmatpush1.msra.mxu0 0.0
    %1551 = vmatprep.subr.mxu0 0.0
    %1552 = vmatpush1.msra.mxu0 0.0
    %1553 = vmatprep.subr.mxu0 0.0
    %1554 = vmatpush1.msra.mxu0 0.0
    %1555 = vmatprep.subr.mxu0 0.0
    %1556 = vmatpush1.msra.mxu0 0.0
    %1557 = vmatprep.subr.mxu0 0.0
    %1558 = vmatpush1.msra.mxu0 0.0
    %1559 = vmatprep.subr.mxu0 0.0
    %1560 = vmatpush1.msra.mxu0 0.0
    %1561 = vmatprep.subr.mxu0 0.0
    %1562 = vmatpush1.msra.mxu0 0.0
    %1563 = vmatprep.subr.mxu0 0.0
    %1564 = vmatpush1.msra.mxu0 0.0
    %1565 = vmatprep.subr.mxu0 0.0
    %1566 = vmatpush1.msra.mxu0 0.0
    %1567 = vmatprep.subr.mxu0 0.0
    %1568 = vmatpush1.msra.mxu0 0.0
    %1569 = vmatprep.subr.mxu0 0.0
    %1570 = vmatpush1.msra.mxu0 0.0
    %1571 = vmatprep.subr.mxu0 0.0
    %1572 = vmatpush1.msra.mxu0 0.0
    %1573 = vmatprep.subr.mxu0 0.0
    %1574 = vmatpush1.msra.mxu0 0.0
    %1575 = vmatprep.subr.mxu0 0.0
    %1576 = vmatpush1.msra.mxu0 0.0
    %1577 = vmatprep.subr.mxu0 0.0
    %1578 = vmatpush1.msra.mxu0 0.0
    %1579 = vmatprep.subr.mxu0 0.0
    %1580 = vmatpush1.msra.mxu0 0.0
    %1581 = vmatprep.subr.mxu0 0.0
    %1582 = vmatpush1.msra.mxu0 0.0
    %1583 = vmatprep.subr.mxu0 0.0
    %1584 = vmatpush1.msra.mxu0 0.0
    %1585 = vmatprep.subr.mxu0 0.0
    %1586 = vmatpush1.msra.mxu0 0.0
    %1587 = vmatprep.mubr.f32.mxu0 0.0
    %1588 = vmatmul.mubr.f32.gmra.mrb[0].mxu0 %v1450
    %v1589 = vpop.f32.mrb[0].mxu0
    %v1590 = vadd.f32 0.0, %v1589
    %v1591 = vpop.f32.mrb[0].mxu0
    %v1592 = vadd.f32 0.0, %v1591
    %1593 = vdwg.mxu0
    %v1594 = vadd.f32 %v1443, %v1519
    %v1595 = vadd.f32 %v1444, %v1521
    %v1596 = vadd.f32 %v1445, %v1590
    %v1597 = vadd.f32 %v1446, %v1592
    %v1598 = vmul.f32 %v1594, 1.442695
    %v1599 = vpow.pop %v1598
    %v1600 = vmul.f32 %v1595, 1.442695
    %v1601 = vpow.pop %v1600
    %v1602 = vmul.f32 %v1596, 1.442695
    %v1603 = vpow.pop %v1602
    %v1604 = vmul.f32 %v1597, 1.442695
    %v1605 = vpow.pop %v1604
    %1606 = vst [vmem:[#allocation2] sm:$0xff] %v1599
    %1607 = vst [vmem:[#allocation2 + $0x8] sm:$0xff] %v1601
    %1608 = vst [vmem:[#allocation2 + $0x10] sm:$0xff] %v1603
    %1609 = vst [vmem:[#allocation2 + $0x18] sm:$0xff] %v1605
    // Predicated region
    $region42: #{tpu_custom_call.1} parent=1 // pred_check
      _
    $region43: #{tpu_custom_call.1} parent=1 // pred_check_branch
      %1611 = sbr.rel (0) target = $region45
    $region44: #{tpu_custom_call.1} parent=1 // pred_region
      %s1613 = ssub.s32 512, 512
      %1614 = vsyncadd [#allocation3], %s1613
      %s1616 = sshll.u32 [#allocation2], 4
      %s1617 = int_to_ptr.vmem [resolvable:$true] %s1616
      %1619 = dma.vmem_to_hbm [thread:$0]  %s1617, 512, %s10, [#allocation3]
    $region45: #{tpu_custom_call.1} parent=1 // pred_fallthru
      _
    // Predicated region
    $region46: #{tpu_custom_call.1} parent=1 // pred_check
      _
    $region47: #{tpu_custom_call.1} parent=1 // pred_check_branch
      %1621 = sbr.rel (0) target = $region49
    $region48: #{tpu_custom_call.1} parent=1 // pred_region
      %1622 = dma.done [#allocation3], 512
    $region49: #{tpu_custom_call.1} parent=1 // pred_fallthru
      _
    %1623 = vsyncpa [#allocation3], 1

</llo_original>
